<compile_context>
chip_gen: v7x
topology: tpu7x:2x2x1
jax: 0.10.0
libtpu: 0.0.40
codegen_flags: <defaults>
</compile_context>

<pallas_src>
import math

import jax
import jax.numpy as jnp
from jax.experimental import pallas as pl
from jax.experimental.pallas import tpu as pltpu

_NEG_LARGE = -3.0e38  # masked-out docs in the per-column max (valid docs always win)


def _round_up(x, m):
    return ((x + m - 1) // m) * m


def _make_kernel(n_docs, tb, k_dim, h_pad):
    """Per batch tile (grid step):
       x_ref  : (n_docs*tb, k_dim)   bf16  pooled BERT outputs, docs-major within tile
       mb_ref : (n_docs*tb, 1)       f32   additive mask bias (0 valid / -3e38 invalid)
       zf_ref : (tb, 1)              f32   1.0 if the row has any valid doc else 0.0
       w_ref  : (k_dim, k_dim+h_pad) bf16  [W_internal | W_fc]   (stored (in, out))
       b_ref  : (1, k_dim+h_pad)     f32   [b_internal | b_fc]
       o_ref  : (tb, h_pad)          f32
    """

    def kernel(x_ref, mb_ref, zf_ref, w_ref, b_ref, o_ref):
        w_int = w_ref[:, :k_dim]            # (K, K)      lane-aligned slices
        w_fc = w_ref[:, k_dim:]             # (K, H_pad)
        b_int = b_ref[:, :k_dim]            # (1, K)
        b_fc = b_ref[:, k_dim:]             # (1, H_pad)

        # fc_internal for ALL docs in this tile in one MXU call (M = D*TB),
        # bf16 inputs, f32 accumulation.
        h = jnp.dot(x_ref[...], w_int,
                    preferred_element_type=jnp.float32)          # (D*TB, K) f32
        # Doc-validity as a single additive bias (one VPU add per vreg).
        h = h + mb_ref[...]

        # torch.max over docs, per feature column: static sublane slices.
        feat = h[0:tb]
        for d in range(1, n_docs):                               # static unroll
            feat = jnp.maximum(feat, h[d * tb:(d + 1) * tb])

        # Bias hoisted out of the doc loop (exact: bias is doc-independent),
        # then zero rows with no valid docs (torch.zeros fallback) via a single
        # multiplicative factor.
        feat = (feat + b_int) * zf_ref[...]                      # (TB, K) f32

        # fc on the pooled feature; lane-dense unmasked store.
        out = jnp.dot(feat.astype(jnp.bfloat16), w_fc,
                      preferred_element_type=jnp.float32) + b_fc # (TB, H_pad)
        o_ref[...] = out

    return kernel


@jax.jit
def message_encoder_bert_forward(pooled, doc_mask, params):
    """pooled:   (B, D, hidden_size) BERT pooler outputs of up to D retrieved docs.
       doc_mask: (B, D) bool — doc d cleared the ES score threshold for item b.
       params:   w_int (K,K), b_int (K,), w_fc (K,hidden_dim), b_fc (hidden_dim,)
                 weights stored (in, out) = transpose of torch nn.Linear.weight.
       returns:  (B, hidden_dim) f32 == fc( max_d fc_internal(pooled_d) ), with a
                 zeros feature when a row has no valid docs (matching the module)."""
    B, D, K = pooled.shape
    assert D >= 1
    assert K % 128 == 0, "BERT hidden size must be lane aligned (768 is)"
    H = params["w_fc"].shape[1]
    H_pad = _round_up(max(H, 128), 128)

    # Batch tile: multiple of 16 sublanes (bf16 packing), capped at 128, sized so
    # that mid/large batches get ~4 grid steps (DMA pipelining + both v7x TCs).
    TB = max(16, min(128, _round_up((B + 3) // 4, 16)))
    B_pad = _round_up(B, TB)
    n_tiles = B_pad // TB

    # Activations: bf16, laid out (n_tiles, D, TB, K) and flattened so each grid
    # step reads one contiguous (D*TB, K) slab -> single merged MXU matmul.
    x = jnp.pad(pooled.astype(jnp.bfloat16), ((0, B_pad - B), (0, 0), (0, 0)))
    x = jnp.transpose(x.reshape(n_tiles, TB, D, K), (0, 2, 1, 3))
    x = x.reshape(n_tiles * D * TB, K)

    # Additive doc-validity bias, same row layout as x (0 valid / -3e38 invalid).
    mb = jnp.where(doc_mask, 0.0, _NEG_LARGE).astype(jnp.float32)       # (B, D)
    mb = jnp.pad(mb, ((0, B_pad - B), (0, 0)), constant_values=_NEG_LARGE)
    mb = jnp.transpose(mb.reshape(n_tiles, TB, D), (0, 2, 1))
    mb = mb.reshape(n_tiles * D * TB, 1)

    # Zero-feature fallback factor: 1.0 if any doc is valid for the row, else 0.0.
    zf = jnp.any(doc_mask, axis=1).astype(jnp.float32)
    zf = jnp.pad(zf, (0, B_pad - B))[:, None]                           # (B_pad, 1)

    # Fold both weight matrices / both biases into one resident input each.
    w_int = params["w_int"].astype(jnp.bfloat16)
    w_fc = jnp.pad(params["w_fc"].astype(jnp.bfloat16), ((0, 0), (0, H_pad - H)))
    w_cat = jnp.concatenate([w_int, w_fc], axis=1)                      # (K, K+H_pad)
    b_int = params["b_int"].astype(jnp.float32)
    b_fc = jnp.pad(params["b_fc"].astype(jnp.float32), (0, H_pad - H))
    b_cat = jnp.concatenate([b_int, b_fc])[None, :]                     # (1, K+H_pad)

    kernel = _make_kernel(D, TB, K, H_pad)

    out = pl.pallas_call(
        kernel,
        out_shape=jax.ShapeDtypeStruct((B_pad, H_pad), jnp.float32),
        grid_spec=pltpu.PrefetchScalarGridSpec(
            num_scalar_prefetch=0,
            grid=(n_tiles,),
            in_specs=[
                pl.BlockSpec((D * TB, K), lambda i: (i, 0)),        # pooled docs (bf16)
                pl.BlockSpec((D * TB, 1), lambda i: (i, 0)),        # additive mask bias
                pl.BlockSpec((TB, 1), lambda i: (i, 0)),            # any-valid factor
                pl.BlockSpec((K, K + H_pad), lambda i: (0, 0)),     # [W_int | W_fc], resident
                pl.BlockSpec((1, K + H_pad), lambda i: (0, 0)),     # [b_int | b_fc], resident
            ],
            out_specs=pl.BlockSpec((TB, H_pad), lambda i: (i, 0)),  # lane-dense store
        ),
        compiler_params=pltpu.CompilerParams(
            dimension_semantics=("parallel",),
            vmem_limit_bytes=32 * 1024 * 1024),
    )(x, mb, zf, w_cat, b_cat)

    return out[:B, :H]


if __name__ == "__main__":
    # Small shapes consistent with the module: batch=4, up to 3 retrieved docs,
    # BERT hidden_size=768, module hidden_dim=64.
    B, D = 4, 3
    HIDDEN_SIZE = 768
    HIDDEN_DIM = 64

    key = jax.random.PRNGKey(0)
    kx, k1, k2, k3, k4 = jax.random.split(key, 5)

    # Stand-in for BERT pooler outputs of the retrieved documents (tanh-bounded).
    pooled = jnp.tanh(jax.random.normal(kx, (B, D, HIDDEN_SIZE), jnp.float32))
    # Which docs cleared the ES score threshold; row 1 has none, exercising the
    # torch.zeros(hidden_size) fallback path.
    doc_mask = jnp.array([[1, 1, 0],
                          [0, 0, 0],
                          [1, 0, 0],
                          [1, 1, 1]], dtype=jnp.bool_)

    bound = 1.0 / math.sqrt(HIDDEN_SIZE)
    params = {
        "w_int": jax.random.uniform(k1, (HIDDEN_SIZE, HIDDEN_SIZE), jnp.float32,
                                    -bound, bound),
        "b_int": jax.random.uniform(k2, (HIDDEN_SIZE,), jnp.float32, -bound, bound),
        "w_fc": jax.random.uniform(k3, (HIDDEN_SIZE, HIDDEN_DIM), jnp.float32,
                                   -bound, bound),
        "b_fc": jax.random.uniform(k4, (HIDDEN_DIM,), jnp.float32, -bound, bound),
    }

    out = message_encoder_bert_forward(pooled, doc_mask, params)
    out = jax.block_until_ready(out)
    assert out.shape == (B, HIDDEN_DIM), out.shape

    # Pure-JAX reference of the same math (bf16-rounded matmul inputs, f32 accum).
    xb = pooled.astype(jnp.bfloat16).astype(jnp.float32)
    wi = params["w_int"].astype(jnp.bfloat16).astype(jnp.float32)
    wf = params["w_fc"].astype(jnp.bfloat16).astype(jnp.float32)
    h = jnp.einsum("bdk,kh->bdh", xb, wi) + params["b_int"]
    h = jnp.where(doc_mask[:, :, None], h, _NEG_LARGE)
    feat = jnp.max(h, axis=1)
    feat = jnp.where(jnp.any(doc_mask, axis=1)[:, None], feat, 0.0)
    ref = feat.astype(jnp.bfloat16).astype(jnp.float32) @ wf + params["b_fc"]
    err = float(jnp.max(jnp.abs(out - ref)))
    assert jnp.allclose(out, ref, atol=2e-3, rtol=2e-3), err

    print("KERNEL_OK")
</pallas_src>

<mosaic_0001>
module attributes {stable_mosaic.version = 11 : i64} {
  func.func @kernel(%arg0: i32, %arg1: memref<48x768xbf16, #tpu.memory_space<vmem>>, %arg2: memref<48x1xf32, #tpu.memory_space<vmem>>, %arg3: memref<16x1xf32, #tpu.memory_space<vmem>>, %arg4: memref<768x896xbf16, #tpu.memory_space<vmem>>, %arg5: memref<1x896xf32, #tpu.memory_space<vmem>>, %arg6: memref<16x128xf32, #tpu.memory_space<vmem>>) attributes {dimension_semantics = [#tpu.dimension_semantics<parallel>], iteration_bounds = array<i64: 1>, scalar_prefetch = 0 : i64, scratch_operands = 0 : i64, tpu.core_type = #tpu.core_type<tc>, window_params = [{transform_indices = @transform_0, window_bounds = array<i64: 48, 768>}, {transform_indices = @transform_1, window_bounds = array<i64: 48, 1>}, {transform_indices = @transform_2, window_bounds = array<i64: 16, 1>}, {pipeline_mode = #tpu.pipeline_mode<synchronous>, transform_indices = @transform_3, window_bounds = array<i64: 768, 896>}, {pipeline_mode = #tpu.pipeline_mode<synchronous>, transform_indices = @transform_4, window_bounds = array<i64: 1, 896>}, {transform_indices = @transform_5, window_bounds = array<i64: 16, 128>}]} {
    %c0 = arith.constant 0 : index
    %c0_0 = arith.constant 0 : index
    %0 = vector.load %arg4[%c0, %c0_0] : memref<768x896xbf16, #tpu.memory_space<vmem>>, vector<768x768xbf16>
    %c0_1 = arith.constant 0 : index
    %c768 = arith.constant 768 : index
    %1 = vector.load %arg4[%c0_1, %c768] : memref<768x896xbf16, #tpu.memory_space<vmem>>, vector<768x128xbf16>
    %c0_2 = arith.constant 0 : index
    %c0_3 = arith.constant 0 : index
    %2 = vector.load %arg5[%c0_2, %c0_3] : memref<1x896xf32, #tpu.memory_space<vmem>>, vector<1x768xf32>
    %c0_4 = arith.constant 0 : index
    %c768_5 = arith.constant 768 : index
    %3 = vector.load %arg5[%c0_4, %c768_5] : memref<1x896xf32, #tpu.memory_space<vmem>>, vector<1x128xf32>
    %c0_6 = arith.constant 0 : index
    %c0_7 = arith.constant 0 : index
    %4 = vector.load %arg1[%c0_6, %c0_7] : memref<48x768xbf16, #tpu.memory_space<vmem>>, vector<48x768xbf16>
    %cst = arith.constant dense<0.000000e+00> : vector<48x768xf32>
    %5 = tpu.matmul %4, %0, %cst {dimension_numbers = #tpu.dot_dimension_numbers<[1], [0], [0], [1], [0, 0, 1, 1], [], []>} : vector<48x768xbf16>, vector<768x768xbf16>, vector<48x768xf32> -> vector<48x768xf32>
    %c0_8 = arith.constant 0 : index
    %c0_9 = arith.constant 0 : index
    %6 = vector.load %arg2[%c0_8, %c0_9] : memref<48x1xf32, #tpu.memory_space<vmem>>, vector<48x1xf32>
    %7 = vector.broadcast %6 : vector<48x1xf32> to vector<48x768xf32>
    %8 = arith.addf %5, %7 : vector<48x768xf32>
    %9 = vector.extract_strided_slice %8 {offsets = [0, 0], sizes = [16, 768], strides = [1, 1]} : vector<48x768xf32> to vector<16x768xf32>
    %10 = vector.extract_strided_slice %8 {offsets = [16, 0], sizes = [16, 768], strides = [1, 1]} : vector<48x768xf32> to vector<16x768xf32>
    %11 = arith.maximumf %9, %10 : vector<16x768xf32>
    %12 = vector.extract_strided_slice %8 {offsets = [32, 0], sizes = [16, 768], strides = [1, 1]} : vector<48x768xf32> to vector<16x768xf32>
    %13 = arith.maximumf %11, %12 : vector<16x768xf32>
    %14 = vector.broadcast %2 : vector<1x768xf32> to vector<16x768xf32>
    %15 = arith.addf %13, %14 : vector<16x768xf32>
    %c0_10 = arith.constant 0 : index
    %c0_11 = arith.constant 0 : index
    %16 = vector.load %arg3[%c0_10, %c0_11] : memref<16x1xf32, #tpu.memory_space<vmem>>, vector<16x1xf32>
    %17 = vector.broadcast %16 : vector<16x1xf32> to vector<16x768xf32>
    %18 = arith.mulf %15, %17 : vector<16x768xf32>
    %19 = arith.truncf %18 : vector<16x768xf32> to vector<16x768xbf16>
    %cst_12 = arith.constant dense<0.000000e+00> : vector<16x128xf32>
    %20 = tpu.matmul %19, %1, %cst_12 {dimension_numbers = #tpu.dot_dimension_numbers<[1], [0], [0], [1], [0, 0, 1, 1], [], []>} : vector<16x768xbf16>, vector<768x128xbf16>, vector<16x128xf32> -> vector<16x128xf32>
    %21 = vector.broadcast %3 : vector<1x128xf32> to vector<16x128xf32>
    %22 = arith.addf %20, %21 : vector<16x128xf32>
    %c0_13 = arith.constant 0 : index
    %c0_14 = arith.constant 0 : index
    %23 = vector.load %arg6[%c0_13, %c0_14] : memref<16x128xf32, #tpu.memory_space<vmem>>, vector<16x128xf32>
    tpu.vector_store %arg6[%c0_13, %c0_14], %22 {strides = array<i32>} : memref<16x128xf32, #tpu.memory_space<vmem>>, vector<16x128xf32>,
    return
  }
  func.func @transform_0(%arg0: i32) -> (i32, i32) {
    %c0_i32 = arith.constant 0 : i32
    %c0_i32_0 = arith.constant 0 : i32
    return %arg0, %c0_i32 : i32, i32
  }
  func.func @transform_1(%arg0: i32) -> (i32, i32) {
    %c0_i32 = arith.constant 0 : i32
    %c0_i32_0 = arith.constant 0 : i32
    return %arg0, %c0_i32 : i32, i32
  }
  func.func @transform_2(%arg0: i32) -> (i32, i32) {
    %c0_i32 = arith.constant 0 : i32
    %c0_i32_0 = arith.constant 0 : i32
    return %arg0, %c0_i32 : i32, i32
  }
  func.func @transform_3(%arg0: i32) -> (i32, i32) {
    %c0_i32 = arith.constant 0 : i32
    %c0_i32_0 = arith.constant 0 : i32
    %c0_i32_1 = arith.constant 0 : i32
    return %c0_i32, %c0_i32_0 : i32, i32
  }
  func.func @transform_4(%arg0: i32) -> (i32, i32) {
    %c0_i32 = arith.constant 0 : i32
    %c0_i32_0 = arith.constant 0 : i32
    %c0_i32_1 = arith.constant 0 : i32
    return %c0_i32, %c0_i32_0 : i32, i32
  }
  func.func @transform_5(%arg0: i32) -> (i32, i32) {
    %c0_i32 = arith.constant 0 : i32
    %c0_i32_0 = arith.constant 0 : i32
    return %arg0, %c0_i32 : i32, i32
  }
}

</mosaic_0001>

<llo_original>
// kernel: message_encoder_bert_forward.1
$region0: #{message_encoder_bert_forward.1}
  #allocation0 [shape = 'u32[]', space=smem, size = 0x4, offset = 0x4, fixed_abs, tag = 'smem constant byte address 0x4 - core index']
  #allocation1 [shape = 'u32[144,128]{1,0:T(1,128)}', space=vmem, size = 0x12000, scoped, tag = 'internal scratch']
  %s0 = inlined_call_operand.vmem [shape: bf16[48,768], index: 0, kind: input, shape index: {}]
  %s1 = inlined_call_operand.vmem [shape: f32[48,1], index: 1, kind: input, shape index: {}]
  %s2 = inlined_call_operand.vmem [shape: f32[16,1], index: 2, kind: input, shape index: {}]
  %s3 = inlined_call_operand.vmem [shape: bf16[768,896], index: 3, kind: input, shape index: {}]
  %s4 = inlined_call_operand.vmem [shape: f32[1,896], index: 4, kind: input, shape index: {}]
  %s5 = inlined_call_operand.vmem [shape: f32[16,128], index: 5, kind: output, shape index: {}]
  %s6 = sld [smem:[#allocation0]]
  $region30: #{message_encoder_bert_forward.1} parent=0
    _
  %s8 = ssub.s32 1, %s6
  %s9 = scalar_select 0, %s8, %s6
  // Predicated region
  $region2: #{message_encoder_bert_forward.1} parent=0 // pred_check
    _
  $region3: #{message_encoder_bert_forward.1} parent=0 // pred_check_branch
    %11 = sbr.rel (0) target = $region5
  $region4: #{message_encoder_bert_forward.1} parent=0 // pred_region
    _
  $region5: #{message_encoder_bert_forward.1} parent=0 // pred_fallthru
    _
  // Predicated region
  $region6: #{message_encoder_bert_forward.1} parent=0 // pred_check
    _
  $region7: #{message_encoder_bert_forward.1} parent=0 // pred_check_branch
    %13 = sbr.rel (0) target = $region9
  $region8: #{message_encoder_bert_forward.1} parent=0 // pred_region
    _
  $region9: #{message_encoder_bert_forward.1} parent=0 // pred_fallthru
    _
  // Predicated region
  $region10: #{message_encoder_bert_forward.1} parent=0 // pred_check
    _
  $region11: #{message_encoder_bert_forward.1} parent=0 // pred_check_branch
    %15 = sbr.rel (0) target = $region13
  $region12: #{message_encoder_bert_forward.1} parent=0 // pred_region
    _
  $region13: #{message_encoder_bert_forward.1} parent=0 // pred_fallthru
    _
  // Predicated region
  $region14: #{message_encoder_bert_forward.1} parent=0 // pred_check
    _
  $region15: #{message_encoder_bert_forward.1} parent=0 // pred_check_branch
    %17 = sbr.rel (0) target = $region17
  $region16: #{message_encoder_bert_forward.1} parent=0 // pred_region
    _
  $region17: #{message_encoder_bert_forward.1} parent=0 // pred_fallthru
    _
  // Predicated region
  $region18: #{message_encoder_bert_forward.1} parent=0 // pred_check
    _
  $region19: #{message_encoder_bert_forward.1} parent=0 // pred_check_branch
    %19 = sbr.rel (0) target = $region21
  $region20: #{message_encoder_bert_forward.1} parent=0 // pred_region
    _
  $region21: #{message_encoder_bert_forward.1} parent=0 // pred_fallthru
    _
  %v21 = vld [vmem:[%s3] sm:$0xff]
  %v22 = vld [vmem:[%s3 + $0x8] sm:$0xff]
  %v23 = vld [vmem:[%s3 + $0x10] sm:$0xff]
  %v24 = vld [vmem:[%s3 + $0x1c] sm:$0xff]
  %v25 = vld [vmem:[%s3 + $0x24] sm:$0xff]
  %v26 = vld [vmem:[%s3 + $0x2c] sm:$0xff]
  %v27 = vld [vmem:[%s3 + $0x38] sm:$0xff]
  %v28 = vld [vmem:[%s3 + $0x40] sm:$0xff]
  %v29 = vld [vmem:[%s3 + $0x48] sm:$0xff]
  %v30 = vld [vmem:[%s3 + $0x54] sm:$0xff]
  %v31 = vld [vmem:[%s3 + $0x5c] sm:$0xff]
  %v32 = vld [vmem:[%s3 + $0x64] sm:$0xff]
  %v33 = vld [vmem:[%s3 + $0x70] sm:$0xff]
  %v34 = vld [vmem:[%s3 + $0x78] sm:$0xff]
  %v35 = vld [vmem:[%s3 + $0x80] sm:$0xff]
  %v36 = vld [vmem:[%s3 + $0x8c] sm:$0xff]
  %v37 = vld [vmem:[%s3 + $0x94] sm:$0xff]
  %v38 = vld [vmem:[%s3 + $0x9c] sm:$0xff]
  %v39 = vld [vmem:[%s3 + $0xa8] sm:$0xff]
  %v40 = vld [vmem:[%s3 + $0xb0] sm:$0xff]
  %v41 = vld [vmem:[%s3 + $0xb8] sm:$0xff]
  %v42 = vld [vmem:[%s3 + $0xc4] sm:$0xff]
  %v43 = vld [vmem:[%s3 + $0xcc] sm:$0xff]
  %v44 = vld [vmem:[%s3 + $0xd4] sm:$0xff]
  %v45 = vld [vmem:[%s3 + $0xe0] sm:$0xff]
  %v46 = vld [vmem:[%s3 + $0xe8] sm:$0xff]
  %v47 = vld [vmem:[%s3 + $0xf0] sm:$0xff]
  %v48 = vld [vmem:[%s3 + $0xfc] sm:$0xff]
  %v49 = vld [vmem:[%s3 + $0x104] sm:$0xff]
  %v50 = vld [vmem:[%s3 + $0x10c] sm:$0xff]
  %v51 = vld [vmem:[%s3 + $0x118] sm:$0xff]
  %v52 = vld [vmem:[%s3 + $0x120] sm:$0xff]
  %v53 = vld [vmem:[%s3 + $0x128] sm:$0xff]
  %v54 = vld [vmem:[%s3 + $0x134] sm:$0xff]
  %v55 = vld [vmem:[%s3 + $0x13c] sm:$0xff]
  %v56 = vld [vmem:[%s3 + $0x144] sm:$0xff]
  %v57 = vld [vmem:[%s3 + $0x150] sm:$0xff]
  %v58 = vld [vmem:[%s3 + $0x158] sm:$0xff]
  %v59 = vld [vmem:[%s3 + $0x160] sm:$0xff]
  %v60 = vld [vmem:[%s3 + $0x16c] sm:$0xff]
  %v61 = vld [vmem:[%s3 + $0x174] sm:$0xff]
  %v62 = vld [vmem:[%s3 + $0x17c] sm:$0xff]
  %v63 = vld [vmem:[%s3 + $0x188] sm:$0xff]
  %v64 = vld [vmem:[%s3 + $0x190] sm:$0xff]
  %v65 = vld [vmem:[%s3 + $0x198] sm:$0xff]
  %v66 = vld [vmem:[%s3 + $0x1a4] sm:$0xff]
  %v67 = vld [vmem:[%s3 + $0x1ac] sm:$0xff]
  %v68 = vld [vmem:[%s3 + $0x1b4] sm:$0xff]
  %v69 = vld [vmem:[%s3 + $0x1c0] sm:$0xff]
  %v70 = vld [vmem:[%s3 + $0x1c8] sm:$0xff]
  %v71 = vld [vmem:[%s3 + $0x1d0] sm:$0xff]
  %v72 = vld [vmem:[%s3 + $0x1dc] sm:$0xff]
  %v73 = vld [vmem:[%s3 + $0x1e4] sm:$0xff]
  %v74 = vld [vmem:[%s3 + $0x1ec] sm:$0xff]
  %v75 = vld [vmem:[%s3 + $0x1f8] sm:$0xff]
  %v76 = vld [vmem:[%s3 + $0x200] sm:$0xff]
  %v77 = vld [vmem:[%s3 + $0x208] sm:$0xff]
  %v78 = vld [vmem:[%s3 + $0x214] sm:$0xff]
  %v79 = vld [vmem:[%s3 + $0x21c] sm:$0xff]
  %v80 = vld [vmem:[%s3 + $0x224] sm:$0xff]
  %v81 = vld [vmem:[%s3 + $0x230] sm:$0xff]
  %v82 = vld [vmem:[%s3 + $0x238] sm:$0xff]
  %v83 = vld [vmem:[%s3 + $0x240] sm:$0xff]
  %v84 = vld [vmem:[%s3 + $0x24c] sm:$0xff]
  %v85 = vld [vmem:[%s3 + $0x254] sm:$0xff]
  %v86 = vld [vmem:[%s3 + $0x25c] sm:$0xff]
  %v87 = vld [vmem:[%s3 + $0x268] sm:$0xff]
  %v88 = vld [vmem:[%s3 + $0x270] sm:$0xff]
  %v89 = vld [vmem:[%s3 + $0x278] sm:$0xff]
  %v90 = vld [vmem:[%s3 + $0x284] sm:$0xff]
  %v91 = vld [vmem:[%s3 + $0x28c] sm:$0xff]
  %v92 = vld [vmem:[%s3 + $0x294] sm:$0xff]
  %v93 = vld [vmem:[%s3 + $0x2a0] sm:$0xff]
  %v94 = vld [vmem:[%s3 + $0x2a8] sm:$0xff]
  %v95 = vld [vmem:[%s3 + $0x2b0] sm:$0xff]
  %v96 = vld [vmem:[%s3 + $0x2bc] sm:$0xff]
  %v97 = vld [vmem:[%s3 + $0x2c4] sm:$0xff]
  %v98 = vld [vmem:[%s3 + $0x2cc] sm:$0xff]
  %v99 = vld [vmem:[%s3 + $0x2d8] sm:$0xff]
  %v100 = vld [vmem:[%s3 + $0x2e0] sm:$0xff]
  %v101 = vld [vmem:[%s3 + $0x2e8] sm:$0xff]
  %v102 = vld [vmem:[%s3 + $0x2f4] sm:$0xff]
  %v103 = vld [vmem:[%s3 + $0x2fc] sm:$0xff]
  %v104 = vld [vmem:[%s3 + $0x304] sm:$0xff]
  %v105 = vld [vmem:[%s3 + $0x310] sm:$0xff]
  %v106 = vld [vmem:[%s3 + $0x318] sm:$0xff]
  %v107 = vld [vmem:[%s3 + $0x320] sm:$0xff]
  %v108 = vld [vmem:[%s3 + $0x32c] sm:$0xff]
  %v109 = vld [vmem:[%s3 + $0x334] sm:$0xff]
  %v110 = vld [vmem:[%s3 + $0x33c] sm:$0xff]
  %v111 = vld [vmem:[%s3 + $0x348] sm:$0xff]
  %v112 = vld [vmem:[%s3 + $0x350] sm:$0xff]
  %v113 = vld [vmem:[%s3 + $0x358] sm:$0xff]
  %v114 = vld [vmem:[%s3 + $0x364] sm:$0xff]
  %v115 = vld [vmem:[%s3 + $0x36c] sm:$0xff]
  %v116 = vld [vmem:[%s3 + $0x374] sm:$0xff]
  %v117 = vld [vmem:[%s3 + $0x380] sm:$0xff]
  %v118 = vld [vmem:[%s3 + $0x388] sm:$0xff]
  %v119 = vld [vmem:[%s3 + $0x390] sm:$0xff]
  %v120 = vld [vmem:[%s3 + $0x39c] sm:$0xff]
  %v121 = vld [vmem:[%s3 + $0x3a4] sm:$0xff]
  %v122 = vld [vmem:[%s3 + $0x3ac] sm:$0xff]
  %v123 = vld [vmem:[%s3 + $0x3b8] sm:$0xff]
  %v124 = vld [vmem:[%s3 + $0x3c0] sm:$0xff]
  %v125 = vld [vmem:[%s3 + $0x3c8] sm:$0xff]
  %v126 = vld [vmem:[%s3 + $0x3d4] sm:$0xff]
  %v127 = vld [vmem:[%s3 + $0x3dc] sm:$0xff]
  %v128 = vld [vmem:[%s3 + $0x3e4] sm:$0xff]
  %v129 = vld [vmem:[%s3 + $0x3f0] sm:$0xff]
  %v130 = vld [vmem:[%s3 + $0x3f8] sm:$0xff]
  %v131 = vld [vmem:[%s3 + $0x400] sm:$0xff]
  %v132 = vld [vmem:[%s3 + $0x40c] sm:$0xff]
  %v133 = vld [vmem:[%s3 + $0x414] sm:$0xff]
  %v134 = vld [vmem:[%s3 + $0x41c] sm:$0xff]
  %v135 = vld [vmem:[%s3 + $0x428] sm:$0xff]
  %v136 = vld [vmem:[%s3 + $0x430] sm:$0xff]
  %v137 = vld [vmem:[%s3 + $0x438] sm:$0xff]
  %v138 = vld [vmem:[%s3 + $0x444] sm:$0xff]
  %v139 = vld [vmem:[%s3 + $0x44c] sm:$0xff]
  %v140 = vld [vmem:[%s3 + $0x454] sm:$0xff]
  %v141 = vld [vmem:[%s3 + $0x460] sm:$0xff]
  %v142 = vld [vmem:[%s3 + $0x468] sm:$0xff]
  %v143 = vld [vmem:[%s3 + $0x470] sm:$0xff]
  %v144 = vld [vmem:[%s3 + $0x47c] sm:$0xff]
  %v145 = vld [vmem:[%s3 + $0x484] sm:$0xff]
  %v146 = vld [vmem:[%s3 + $0x48c] sm:$0xff]
  %v147 = vld [vmem:[%s3 + $0x498] sm:$0xff]
  %v148 = vld [vmem:[%s3 + $0x4a0] sm:$0xff]
  %v149 = vld [vmem:[%s3 + $0x4a8] sm:$0xff]
  %v150 = vld [vmem:[%s3 + $0x4b4] sm:$0xff]
  %v151 = vld [vmem:[%s3 + $0x4bc] sm:$0xff]
  %v152 = vld [vmem:[%s3 + $0x4c4] sm:$0xff]
  %v153 = vld [vmem:[%s3 + $0x4d0] sm:$0xff]
  %v154 = vld [vmem:[%s3 + $0x4d8] sm:$0xff]
  %v155 = vld [vmem:[%s3 + $0x4e0] sm:$0xff]
  %v156 = vld [vmem:[%s3 + $0x4ec] sm:$0xff]
  %v157 = vld [vmem:[%s3 + $0x4f4] sm:$0xff]
  %v158 = vld [vmem:[%s3 + $0x4fc] sm:$0xff]
  %v159 = vld [vmem:[%s3 + $0x508] sm:$0xff]
  %v160 = vld [vmem:[%s3 + $0x510] sm:$0xff]
  %v161 = vld [vmem:[%s3 + $0x518] sm:$0xff]
  %v162 = vld [vmem:[%s3 + $0x524] sm:$0xff]
  %v163 = vld [vmem:[%s3 + $0x52c] sm:$0xff]
  %v164 = vld [vmem:[%s3 + $0x534] sm:$0xff]
  %v165 = vld [vmem:[%s3 + $0x540] sm:$0xff]
  %v166 = vld [vmem:[%s3 + $0x548] sm:$0xff]
  %v167 = vld [vmem:[%s3 + $0x550] sm:$0xff]
  %v168 = vld [vmem:[%s3 + $0x55c] sm:$0xff]
  %v169 = vld [vmem:[%s3 + $0x564] sm:$0xff]
  %v170 = vld [vmem:[%s3 + $0x56c] sm:$0xff]
  %v171 = vld [vmem:[%s3 + $0x578] sm:$0xff]
  %v172 = vld [vmem:[%s3 + $0x580] sm:$0xff]
  %v173 = vld [vmem:[%s3 + $0x588] sm:$0xff]
  %v174 = vld [vmem:[%s3 + $0x594] sm:$0xff]
  %v175 = vld [vmem:[%s3 + $0x59c] sm:$0xff]
  %v176 = vld [vmem:[%s3 + $0x5a4] sm:$0xff]
  %v177 = vld [vmem:[%s3 + $0x5b0] sm:$0xff]
  %v178 = vld [vmem:[%s3 + $0x5b8] sm:$0xff]
  %v179 = vld [vmem:[%s3 + $0x5c0] sm:$0xff]
  %v180 = vld [vmem:[%s3 + $0x5cc] sm:$0xff]
  %v181 = vld [vmem:[%s3 + $0x5d4] sm:$0xff]
  %v182 = vld [vmem:[%s3 + $0x5dc] sm:$0xff]
  %v183 = vld [vmem:[%s3 + $0x5e8] sm:$0xff]
  %v184 = vld [vmem:[%s3 + $0x5f0] sm:$0xff]
  %v185 = vld [vmem:[%s3 + $0x5f8] sm:$0xff]
  %v186 = vld [vmem:[%s3 + $0x604] sm:$0xff]
  %v187 = vld [vmem:[%s3 + $0x60c] sm:$0xff]
  %v188 = vld [vmem:[%s3 + $0x614] sm:$0xff]
  %v189 = vld [vmem:[%s3 + $0x620] sm:$0xff]
  %v190 = vld [vmem:[%s3 + $0x628] sm:$0xff]
  %v191 = vld [vmem:[%s3 + $0x630] sm:$0xff]
  %v192 = vld [vmem:[%s3 + $0x63c] sm:$0xff]
  %v193 = vld [vmem:[%s3 + $0x644] sm:$0xff]
  %v194 = vld [vmem:[%s3 + $0x64c] sm:$0xff]
  %v195 = vld [vmem:[%s3 + $0x658] sm:$0xff]
  %v196 = vld [vmem:[%s3 + $0x660] sm:$0xff]
  %v197 = vld [vmem:[%s3 + $0x668] sm:$0xff]
  %v198 = vld [vmem:[%s3 + $0x674] sm:$0xff]
  %v199 = vld [vmem:[%s3 + $0x67c] sm:$0xff]
  %v200 = vld [vmem:[%s3 + $0x684] sm:$0xff]
  %v201 = vld [vmem:[%s3 + $0x690] sm:$0xff]
  %v202 = vld [vmem:[%s3 + $0x698] sm:$0xff]
  %v203 = vld [vmem:[%s3 + $0x6a0] sm:$0xff]
  %v204 = vld [vmem:[%s3 + $0x6ac] sm:$0xff]
  %v205 = vld [vmem:[%s3 + $0x6b4] sm:$0xff]
  %v206 = vld [vmem:[%s3 + $0x6bc] sm:$0xff]
  %v207 = vld [vmem:[%s3 + $0x6c8] sm:$0xff]
  %v208 = vld [vmem:[%s3 + $0x6d0] sm:$0xff]
  %v209 = vld [vmem:[%s3 + $0x6d8] sm:$0xff]
  %v210 = vld [vmem:[%s3 + $0x6e4] sm:$0xff]
  %v211 = vld [vmem:[%s3 + $0x6ec] sm:$0xff]
  %v212 = vld [vmem:[%s3 + $0x6f4] sm:$0xff]
  %v213 = vld [vmem:[%s3 + $0x700] sm:$0xff]
  %v214 = vld [vmem:[%s3 + $0x708] sm:$0xff]
  %v215 = vld [vmem:[%s3 + $0x710] sm:$0xff]
  %v216 = vld [vmem:[%s3 + $0x71c] sm:$0xff]
  %v217 = vld [vmem:[%s3 + $0x724] sm:$0xff]
  %v218 = vld [vmem:[%s3 + $0x72c] sm:$0xff]
  %v219 = vld [vmem:[%s3 + $0x738] sm:$0xff]
  %v220 = vld [vmem:[%s3 + $0x740] sm:$0xff]
  %v221 = vld [vmem:[%s3 + $0x748] sm:$0xff]
  %v222 = vld [vmem:[%s3 + $0x754] sm:$0xff]
  %v223 = vld [vmem:[%s3 + $0x75c] sm:$0xff]
  %v224 = vld [vmem:[%s3 + $0x764] sm:$0xff]
  %v225 = vld [vmem:[%s3 + $0x770] sm:$0xff]
  %v226 = vld [vmem:[%s3 + $0x778] sm:$0xff]
  %v227 = vld [vmem:[%s3 + $0x780] sm:$0xff]
  %v228 = vld [vmem:[%s3 + $0x78c] sm:$0xff]
  %v229 = vld [vmem:[%s3 + $0x794] sm:$0xff]
  %v230 = vld [vmem:[%s3 + $0x79c] sm:$0xff]
  %v231 = vld [vmem:[%s3 + $0x7a8] sm:$0xff]
  %v232 = vld [vmem:[%s3 + $0x7b0] sm:$0xff]
  %v233 = vld [vmem:[%s3 + $0x7b8] sm:$0xff]
  %v234 = vld [vmem:[%s3 + $0x7c4] sm:$0xff]
  %v235 = vld [vmem:[%s3 + $0x7cc] sm:$0xff]
  %v236 = vld [vmem:[%s3 + $0x7d4] sm:$0xff]
  %v237 = vld [vmem:[%s3 + $0x7e0] sm:$0xff]
  %v238 = vld [vmem:[%s3 + $0x7e8] sm:$0xff]
  %v239 = vld [vmem:[%s3 + $0x7f0] sm:$0xff]
  %v240 = vld [vmem:[%s3 + $0x7fc] sm:$0xff]
  %v241 = vld [vmem:[%s3 + $0x804] sm:$0xff]
  %v242 = vld [vmem:[%s3 + $0x80c] sm:$0xff]
  %v243 = vld [vmem:[%s3 + $0x818] sm:$0xff]
  %v244 = vld [vmem:[%s3 + $0x820] sm:$0xff]
  %v245 = vld [vmem:[%s3 + $0x828] sm:$0xff]
  %v246 = vld [vmem:[%s3 + $0x834] sm:$0xff]
  %v247 = vld [vmem:[%s3 + $0x83c] sm:$0xff]
  %v248 = vld [vmem:[%s3 + $0x844] sm:$0xff]
  %v249 = vld [vmem:[%s3 + $0x850] sm:$0xff]
  %v250 = vld [vmem:[%s3 + $0x858] sm:$0xff]
  %v251 = vld [vmem:[%s3 + $0x860] sm:$0xff]
  %v252 = vld [vmem:[%s3 + $0x86c] sm:$0xff]
  %v253 = vld [vmem:[%s3 + $0x874] sm:$0xff]
  %v254 = vld [vmem:[%s3 + $0x87c] sm:$0xff]
  %v255 = vld [vmem:[%s3 + $0x888] sm:$0xff]
  %v256 = vld [vmem:[%s3 + $0x890] sm:$0xff]
  %v257 = vld [vmem:[%s3 + $0x898] sm:$0xff]
  %v258 = vld [vmem:[%s3 + $0x8a4] sm:$0xff]
  %v259 = vld [vmem:[%s3 + $0x8ac] sm:$0xff]
  %v260 = vld [vmem:[%s3 + $0x8b4] sm:$0xff]
  %v261 = vld [vmem:[%s3 + $0x8c0] sm:$0xff]
  %v262 = vld [vmem:[%s3 + $0x8c8] sm:$0xff]
  %v263 = vld [vmem:[%s3 + $0x8d0] sm:$0xff]
  %v264 = vld [vmem:[%s3 + $0x8dc] sm:$0xff]
  %v265 = vld [vmem:[%s3 + $0x8e4] sm:$0xff]
  %v266 = vld [vmem:[%s3 + $0x8ec] sm:$0xff]
  %v267 = vld [vmem:[%s3 + $0x8f8] sm:$0xff]
  %v268 = vld [vmem:[%s3 + $0x900] sm:$0xff]
  %v269 = vld [vmem:[%s3 + $0x908] sm:$0xff]
  %v270 = vld [vmem:[%s3 + $0x914] sm:$0xff]
  %v271 = vld [vmem:[%s3 + $0x91c] sm:$0xff]
  %v272 = vld [vmem:[%s3 + $0x924] sm:$0xff]
  %v273 = vld [vmem:[%s3 + $0x930] sm:$0xff]
  %v274 = vld [vmem:[%s3 + $0x938] sm:$0xff]
  %v275 = vld [vmem:[%s3 + $0x940] sm:$0xff]
  %v276 = vld [vmem:[%s3 + $0x94c] sm:$0xff]
  %v277 = vld [vmem:[%s3 + $0x954] sm:$0xff]
  %v278 = vld [vmem:[%s3 + $0x95c] sm:$0xff]
  %v279 = vld [vmem:[%s3 + $0x968] sm:$0xff]
  %v280 = vld [vmem:[%s3 + $0x970] sm:$0xff]
  %v281 = vld [vmem:[%s3 + $0x978] sm:$0xff]
  %v282 = vld [vmem:[%s3 + $0x984] sm:$0xff]
  %v283 = vld [vmem:[%s3 + $0x98c] sm:$0xff]
  %v284 = vld [vmem:[%s3 + $0x994] sm:$0xff]
  %v285 = vld [vmem:[%s3 + $0x9a0] sm:$0xff]
  %v286 = vld [vmem:[%s3 + $0x9a8] sm:$0xff]
  %v287 = vld [vmem:[%s3 + $0x9b0] sm:$0xff]
  %v288 = vld [vmem:[%s3 + $0x9bc] sm:$0xff]
  %v289 = vld [vmem:[%s3 + $0x9c4] sm:$0xff]
  %v290 = vld [vmem:[%s3 + $0x9cc] sm:$0xff]
  %v291 = vld [vmem:[%s3 + $0x9d8] sm:$0xff]
  %v292 = vld [vmem:[%s3 + $0x9e0] sm:$0xff]
  %v293 = vld [vmem:[%s3 + $0x9e8] sm:$0xff]
  %v294 = vld [vmem:[%s3 + $0x9f4] sm:$0xff]
  %v295 = vld [vmem:[%s3 + $0x9fc] sm:$0xff]
  %v296 = vld [vmem:[%s3 + $0xa04] sm:$0xff]
  %v297 = vld [vmem:[%s3 + $0xa10] sm:$0xff]
  %v298 = vld [vmem:[%s3 + $0xa18] sm:$0xff]
  %v299 = vld [vmem:[%s3 + $0xa20] sm:$0xff]
  %v300 = vld [vmem:[%s3 + $0xa2c] sm:$0xff]
  %v301 = vld [vmem:[%s3 + $0xa34] sm:$0xff]
  %v302 = vld [vmem:[%s3 + $0xa3c] sm:$0xff]
  %v303 = vld [vmem:[%s3 + $0xa48] sm:$0xff]
  %v304 = vld [vmem:[%s3 + $0xa50] sm:$0xff]
  %v305 = vld [vmem:[%s3 + $0xa58] sm:$0xff]
  %v306 = vld [vmem:[%s3 + $0xa64] sm:$0xff]
  %v307 = vld [vmem:[%s3 + $0xa6c] sm:$0xff]
  %v308 = vld [vmem:[%s3 + $0xa74] sm:$0xff]
  %v309 = vld [vmem:[%s3 + $0x18] sm:$0xf]
  %v310 = vld [vmem:[%s3 + $0x34] sm:$0xf]
  %v311 = vld [vmem:[%s3 + $0x50] sm:$0xf]
  %v312 = vld [vmem:[%s3 + $0x6c] sm:$0xf]
  %v313 = vld [vmem:[%s3 + $0x88] sm:$0xf]
  %v314 = vld [vmem:[%s3 + $0xa4] sm:$0xf]
  %v315 = vld [vmem:[%s3 + $0xc0] sm:$0xf]
  %v316 = vld [vmem:[%s3 + $0xdc] sm:$0xf]
  %v317 = vld [vmem:[%s3 + $0xf8] sm:$0xf]
  %v318 = vld [vmem:[%s3 + $0x114] sm:$0xf]
  %v319 = vld [vmem:[%s3 + $0x130] sm:$0xf]
  %v320 = vld [vmem:[%s3 + $0x14c] sm:$0xf]
  %v321 = vld [vmem:[%s3 + $0x168] sm:$0xf]
  %v322 = vld [vmem:[%s3 + $0x184] sm:$0xf]
  %v323 = vld [vmem:[%s3 + $0x1a0] sm:$0xf]
  %v324 = vld [vmem:[%s3 + $0x1bc] sm:$0xf]
  %v325 = vld [vmem:[%s3 + $0x1d8] sm:$0xf]
  %v326 = vld [vmem:[%s3 + $0x1f4] sm:$0xf]
  %v327 = vld [vmem:[%s3 + $0x210] sm:$0xf]
  %v328 = vld [vmem:[%s3 + $0x22c] sm:$0xf]
  %v329 = vld [vmem:[%s3 + $0x248] sm:$0xf]
  %v330 = vld [vmem:[%s3 + $0x264] sm:$0xf]
  %v331 = vld [vmem:[%s3 + $0x280] sm:$0xf]
  %v332 = vld [vmem:[%s3 + $0x29c] sm:$0xf]
  %v333 = vld [vmem:[%s3 + $0x2b8] sm:$0xf]
  %v334 = vld [vmem:[%s3 + $0x2d4] sm:$0xf]
  %v335 = vld [vmem:[%s3 + $0x2f0] sm:$0xf]
  %v336 = vld [vmem:[%s3 + $0x30c] sm:$0xf]
  %v337 = vld [vmem:[%s3 + $0x328] sm:$0xf]
  %v338 = vld [vmem:[%s3 + $0x344] sm:$0xf]
  %v339 = vld [vmem:[%s3 + $0x360] sm:$0xf]
  %v340 = vld [vmem:[%s3 + $0x37c] sm:$0xf]
  %v341 = vld [vmem:[%s3 + $0x398] sm:$0xf]
  %v342 = vld [vmem:[%s3 + $0x3b4] sm:$0xf]
  %v343 = vld [vmem:[%s3 + $0x3d0] sm:$0xf]
  %v344 = vld [vmem:[%s3 + $0x3ec] sm:$0xf]
  %v345 = vld [vmem:[%s3 + $0x408] sm:$0xf]
  %v346 = vld [vmem:[%s3 + $0x424] sm:$0xf]
  %v347 = vld [vmem:[%s3 + $0x440] sm:$0xf]
  %v348 = vld [vmem:[%s3 + $0x45c] sm:$0xf]
  %v349 = vld [vmem:[%s3 + $0x478] sm:$0xf]
  %v350 = vld [vmem:[%s3 + $0x494] sm:$0xf]
  %v351 = vld [vmem:[%s3 + $0x4b0] sm:$0xf]
  %v352 = vld [vmem:[%s3 + $0x4cc] sm:$0xf]
  %v353 = vld [vmem:[%s3 + $0x4e8] sm:$0xf]
  %v354 = vld [vmem:[%s3 + $0x504] sm:$0xf]
  %v355 = vld [vmem:[%s3 + $0x520] sm:$0xf]
  %v356 = vld [vmem:[%s3 + $0x53c] sm:$0xf]
  %v357 = vld [vmem:[%s3 + $0x558] sm:$0xf]
  %v358 = vld [vmem:[%s3 + $0x574] sm:$0xf]
  %v359 = vld [vmem:[%s3 + $0x590] sm:$0xf]
  %v360 = vld [vmem:[%s3 + $0x5ac] sm:$0xf]
  %v361 = vld [vmem:[%s3 + $0x5c8] sm:$0xf]
  %v362 = vld [vmem:[%s3 + $0x5e4] sm:$0xf]
  %v363 = vld [vmem:[%s3 + $0x600] sm:$0xf]
  %v364 = vld [vmem:[%s3 + $0x61c] sm:$0xf]
  %v365 = vld [vmem:[%s3 + $0x638] sm:$0xf]
  %v366 = vld [vmem:[%s3 + $0x654] sm:$0xf]
  %v367 = vld [vmem:[%s3 + $0x670] sm:$0xf]
  %v368 = vld [vmem:[%s3 + $0x68c] sm:$0xf]
  %v369 = vld [vmem:[%s3 + $0x6a8] sm:$0xf]
  %v370 = vld [vmem:[%s3 + $0x6c4] sm:$0xf]
  %v371 = vld [vmem:[%s3 + $0x6e0] sm:$0xf]
  %v372 = vld [vmem:[%s3 + $0x6fc] sm:$0xf]
  %v373 = vld [vmem:[%s3 + $0x718] sm:$0xf]
  %v374 = vld [vmem:[%s3 + $0x734] sm:$0xf]
  %v375 = vld [vmem:[%s3 + $0x750] sm:$0xf]
  %v376 = vld [vmem:[%s3 + $0x76c] sm:$0xf]
  %v377 = vld [vmem:[%s3 + $0x788] sm:$0xf]
  %v378 = vld [vmem:[%s3 + $0x7a4] sm:$0xf]
  %v379 = vld [vmem:[%s3 + $0x7c0] sm:$0xf]
  %v380 = vld [vmem:[%s3 + $0x7dc] sm:$0xf]
  %v381 = vld [vmem:[%s3 + $0x7f8] sm:$0xf]
  %v382 = vld [vmem:[%s3 + $0x814] sm:$0xf]
  %v383 = vld [vmem:[%s3 + $0x830] sm:$0xf]
  %v384 = vld [vmem:[%s3 + $0x84c] sm:$0xf]
  %v385 = vld [vmem:[%s3 + $0x868] sm:$0xf]
  %v386 = vld [vmem:[%s3 + $0x884] sm:$0xf]
  %v387 = vld [vmem:[%s3 + $0x8a0] sm:$0xf]
  %v388 = vld [vmem:[%s3 + $0x8bc] sm:$0xf]
  %v389 = vld [vmem:[%s3 + $0x8d8] sm:$0xf]
  %v390 = vld [vmem:[%s3 + $0x8f4] sm:$0xf]
  %v391 = vld [vmem:[%s3 + $0x910] sm:$0xf]
  %v392 = vld [vmem:[%s3 + $0x92c] sm:$0xf]
  %v393 = vld [vmem:[%s3 + $0x948] sm:$0xf]
  %v394 = vld [vmem:[%s3 + $0x964] sm:$0xf]
  %v395 = vld [vmem:[%s3 + $0x980] sm:$0xf]
  %v396 = vld [vmem:[%s3 + $0x99c] sm:$0xf]
  %v397 = vld [vmem:[%s3 + $0x9b8] sm:$0xf]
  %v398 = vld [vmem:[%s3 + $0x9d4] sm:$0xf]
  %v399 = vld [vmem:[%s3 + $0x9f0] sm:$0xf]
  %v400 = vld [vmem:[%s3 + $0xa0c] sm:$0xf]
  %v401 = vld [vmem:[%s3 + $0xa28] sm:$0xf]
  %v402 = vld [vmem:[%s3 + $0xa44] sm:$0xf]
  %v403 = vld [vmem:[%s3 + $0xa60] sm:$0xf]
  %v404 = vld [vmem:[%s3 + $0xa7c] sm:$0xf]
  %v405 = vld [vmem:[%s4] sm:$0x3f]
  %v406 = vld [vmem:[%s4 + $0x6] sm:$0x1]
  %v407 = vld [vmem:[%s0] sm:$0xff]
  %v408 = vld [vmem:[%s0 + $0x8] sm:$0xff]
  %v409 = vld [vmem:[%s0 + $0x10] sm:$0xff]
  %v410 = vld [vmem:[%s0 + $0x18] sm:$0xff]
  %v411 = vld [vmem:[%s0 + $0x20] sm:$0xff]
  %v412 = vld [vmem:[%s0 + $0x28] sm:$0xff]
  %v413 = vld [vmem:[%s0 + $0x30] sm:$0xff]
  %v414 = vld [vmem:[%s0 + $0x38] sm:$0xff]
  %v415 = vld [vmem:[%s0 + $0x40] sm:$0xff]
  %v416 = vld [vmem:[%s0 + $0x48] sm:$0xff]
  %v417 = vld [vmem:[%s0 + $0x50] sm:$0xff]
  %v418 = vld [vmem:[%s0 + $0x58] sm:$0xff]
  %v419 = vld [vmem:[%s0 + $0x60] sm:$0xff]
  %v420 = vld [vmem:[%s0 + $0x68] sm:$0xff]
  %v421 = vld [vmem:[%s0 + $0x70] sm:$0xff]
  %v422 = vld [vmem:[%s0 + $0x78] sm:$0xff]
  %v423 = vld [vmem:[%s0 + $0x80] sm:$0xff]
  %v424 = vld [vmem:[%s0 + $0x88] sm:$0xff]
  %v425 = vld [vmem:[%s1] sm:$0xff]
  %v426 = vld [vmem:[%s1 + $0x8] sm:$0xff]
  %v427 = vld [vmem:[%s1 + $0x10] sm:$0xff]
  %v428 = vld [vmem:[%s1 + $0x18] sm:$0xff]
  %v429 = vld [vmem:[%s1 + $0x20] sm:$0xff]
  %v430 = vld [vmem:[%s1 + $0x28] sm:$0xff]
  %432 = vset.pattern.permute.xlu0 0
  %433 = vperm.xlu0 %432, %v425
  %v434 = vpop.permute.xlu0 %433
  %437 = vset.pattern.permute.xlu0 0
  %438 = vperm.xlu0 %437, %v426
  %v439 = vpop.permute.xlu0 %438
  %442 = vset.pattern.permute.xlu0 0
  %443 = vperm.xlu0 %442, %v427
  %v444 = vpop.permute.xlu0 %443
  %447 = vset.pattern.permute.xlu0 0
  %448 = vperm.xlu0 %447, %v428
  %v449 = vpop.permute.xlu0 %448
  %452 = vset.pattern.permute.xlu0 0
  %453 = vperm.xlu0 %452, %v429
  %v454 = vpop.permute.xlu0 %453
  %457 = vset.pattern.permute.xlu0 0
  %458 = vperm.xlu0 %457, %v430
  %v459 = vpop.permute.xlu0 %458
  %v479 = vunpack.c.l.b16 %v407
  %v480 = vunpack.c.h.b16 %v407
  %v481 = vunpack.c.l.b16 %v408
  %v482 = vunpack.c.h.b16 %v408
  %v483 = vunpack.c.l.b16 %v409
  %v484 = vunpack.c.h.b16 %v409
  %v485 = vunpack.c.l.b16 %v410
  %v486 = vunpack.c.h.b16 %v410
  %v487 = vunpack.c.l.b16 %v411
  %v488 = vunpack.c.h.b16 %v411
  %v489 = vunpack.c.l.b16 %v412
  %v490 = vunpack.c.h.b16 %v412
  %v491 = vunpack.c.l.b16 %v413
  %v492 = vunpack.c.h.b16 %v413
  %v493 = vunpack.c.l.b16 %v414
  %v494 = vunpack.c.h.b16 %v414
  %v495 = vunpack.c.l.b16 %v415
  %v496 = vunpack.c.h.b16 %v415
  %v497 = vunpack.c.l.b16 %v416
  %v498 = vunpack.c.h.b16 %v416
  %v499 = vunpack.c.l.b16 %v417
  %v500 = vunpack.c.h.b16 %v417
  %v501 = vunpack.c.l.b16 %v418
  %v502 = vunpack.c.h.b16 %v418
  %v503 = vunpack.c.l.b16 %v419
  %v504 = vunpack.c.h.b16 %v419
  %v505 = vunpack.c.l.b16 %v420
  %v506 = vunpack.c.h.b16 %v420
  %v507 = vunpack.c.l.b16 %v421
  %v508 = vunpack.c.h.b16 %v421
  %v509 = vunpack.c.l.b16 %v422
  %v510 = vunpack.c.h.b16 %v422
  %v511 = vunpack.c.l.b16 %v423
  %v512 = vunpack.c.h.b16 %v423
  %v513 = vunpack.c.l.b16 %v424
  %v514 = vunpack.c.h.b16 %v424
  %v515 = vpack.c.b16 %v485, %v479
  %v516 = vpack.c.b16 %v486, %v480
  %v517 = vpack.c.b16 %v487, %v481
  %v518 = vpack.c.b16 %v488, %v482
  %v519 = vpack.c.b16 %v489, %v483
  %v520 = vpack.c.b16 %v490, %v484
  %v521 = vpack.c.b16 %v497, %v491
  %v522 = vpack.c.b16 %v498, %v492
  %v523 = vpack.c.b16 %v499, %v493
  %v524 = vpack.c.b16 %v500, %v494
  %v525 = vpack.c.b16 %v501, %v495
  %v526 = vpack.c.b16 %v502, %v496
  %v527 = vpack.c.b16 %v509, %v503
  %v528 = vpack.c.b16 %v510, %v504
  %v529 = vpack.c.b16 %v511, %v505
  %v530 = vpack.c.b16 %v512, %v506
  %v531 = vpack.c.b16 %v513, %v507
  %v532 = vpack.c.b16 %v514, %v508
  %v839 = vunpack.c.l.b16 %v21
  %v840 = vunpack.c.h.b16 %v21
  %v841 = vunpack.c.l.b16 %v22
  %v842 = vunpack.c.h.b16 %v22
  %v843 = vunpack.c.l.b16 %v23
  %v844 = vunpack.c.h.b16 %v23
  %v845 = vunpack.c.l.b16 %v24
  %v846 = vunpack.c.h.b16 %v24
  %v847 = vunpack.c.l.b16 %v25
  %v848 = vunpack.c.h.b16 %v25
  %v849 = vunpack.c.l.b16 %v26
  %v850 = vunpack.c.h.b16 %v26
  %v851 = vunpack.c.l.b16 %v27
  %v852 = vunpack.c.h.b16 %v27
  %v853 = vunpack.c.l.b16 %v28
  %v854 = vunpack.c.h.b16 %v28
  %v855 = vunpack.c.l.b16 %v29
  %v856 = vunpack.c.h.b16 %v29
  %v857 = vunpack.c.l.b16 %v30
  %v858 = vunpack.c.h.b16 %v30
  %v859 = vunpack.c.l.b16 %v31
  %v860 = vunpack.c.h.b16 %v31
  %v861 = vunpack.c.l.b16 %v32
  %v862 = vunpack.c.h.b16 %v32
  %v863 = vunpack.c.l.b16 %v33
  %v864 = vunpack.c.h.b16 %v33
  %v865 = vunpack.c.l.b16 %v34
  %v866 = vunpack.c.h.b16 %v34
  %v867 = vunpack.c.l.b16 %v35
  %v868 = vunpack.c.h.b16 %v35
  %v869 = vunpack.c.l.b16 %v36
  %v870 = vunpack.c.h.b16 %v36
  %v871 = vunpack.c.l.b16 %v37
  %v872 = vunpack.c.h.b16 %v37
  %v873 = vunpack.c.l.b16 %v38
  %v874 = vunpack.c.h.b16 %v38
  %v875 = vunpack.c.l.b16 %v39
  %v876 = vunpack.c.h.b16 %v39
  %v877 = vunpack.c.l.b16 %v40
  %v878 = vunpack.c.h.b16 %v40
  %v879 = vunpack.c.l.b16 %v41
  %v880 = vunpack.c.h.b16 %v41
  %v881 = vunpack.c.l.b16 %v42
  %v882 = vunpack.c.h.b16 %v42
  %v883 = vunpack.c.l.b16 %v43
  %v884 = vunpack.c.h.b16 %v43
  %v885 = vunpack.c.l.b16 %v44
  %v886 = vunpack.c.h.b16 %v44
  %v887 = vunpack.c.l.b16 %v45
  %v888 = vunpack.c.h.b16 %v45
  %v889 = vunpack.c.l.b16 %v46
  %v890 = vunpack.c.h.b16 %v46
  %v891 = vunpack.c.l.b16 %v47
  %v892 = vunpack.c.h.b16 %v47
  %v893 = vunpack.c.l.b16 %v48
  %v894 = vunpack.c.h.b16 %v48
  %v895 = vunpack.c.l.b16 %v49
  %v896 = vunpack.c.h.b16 %v49
  %v897 = vunpack.c.l.b16 %v50
  %v898 = vunpack.c.h.b16 %v50
  %v899 = vunpack.c.l.b16 %v51
  %v900 = vunpack.c.h.b16 %v51
  %v901 = vunpack.c.l.b16 %v52
  %v902 = vunpack.c.h.b16 %v52
  %v903 = vunpack.c.l.b16 %v53
  %v904 = vunpack.c.h.b16 %v53
  %v905 = vunpack.c.l.b16 %v54
  %v906 = vunpack.c.h.b16 %v54
  %v907 = vunpack.c.l.b16 %v55
  %v908 = vunpack.c.h.b16 %v55
  %v909 = vunpack.c.l.b16 %v56
  %v910 = vunpack.c.h.b16 %v56
  %v911 = vunpack.c.l.b16 %v57
  %v912 = vunpack.c.h.b16 %v57
  %v913 = vunpack.c.l.b16 %v58
  %v914 = vunpack.c.h.b16 %v58
  %v915 = vunpack.c.l.b16 %v59
  %v916 = vunpack.c.h.b16 %v59
  %v917 = vunpack.c.l.b16 %v60
  %v918 = vunpack.c.h.b16 %v60
  %v919 = vunpack.c.l.b16 %v61
  %v920 = vunpack.c.h.b16 %v61
  %v921 = vunpack.c.l.b16 %v62
  %v922 = vunpack.c.h.b16 %v62
  %v923 = vunpack.c.l.b16 %v63
  %v924 = vunpack.c.h.b16 %v63
  %v925 = vunpack.c.l.b16 %v64
  %v926 = vunpack.c.h.b16 %v64
  %v927 = vunpack.c.l.b16 %v65
  %v928 = vunpack.c.h.b16 %v65
  %v929 = vunpack.c.l.b16 %v66
  %v930 = vunpack.c.h.b16 %v66
  %v931 = vunpack.c.l.b16 %v67
  %v932 = vunpack.c.h.b16 %v67
  %v933 = vunpack.c.l.b16 %v68
  %v934 = vunpack.c.h.b16 %v68
  %v935 = vunpack.c.l.b16 %v69
  %v936 = vunpack.c.h.b16 %v69
  %v937 = vunpack.c.l.b16 %v70
  %v938 = vunpack.c.h.b16 %v70
  %v939 = vunpack.c.l.b16 %v71
  %v940 = vunpack.c.h.b16 %v71
  %v941 = vunpack.c.l.b16 %v72
  %v942 = vunpack.c.h.b16 %v72
  %v943 = vunpack.c.l.b16 %v73
  %v944 = vunpack.c.h.b16 %v73
  %v945 = vunpack.c.l.b16 %v74
  %v946 = vunpack.c.h.b16 %v74
  %v947 = vunpack.c.l.b16 %v75
  %v948 = vunpack.c.h.b16 %v75
  %v949 = vunpack.c.l.b16 %v76
  %v950 = vunpack.c.h.b16 %v76
  %v951 = vunpack.c.l.b16 %v77
  %v952 = vunpack.c.h.b16 %v77
  %v953 = vunpack.c.l.b16 %v78
  %v954 = vunpack.c.h.b16 %v78
  %v955 = vunpack.c.l.b16 %v79
  %v956 = vunpack.c.h.b16 %v79
  %v957 = vunpack.c.l.b16 %v80
  %v958 = vunpack.c.h.b16 %v80
  %v959 = vunpack.c.l.b16 %v81
  %v960 = vunpack.c.h.b16 %v81
  %v961 = vunpack.c.l.b16 %v82
  %v962 = vunpack.c.h.b16 %v82
  %v963 = vunpack.c.l.b16 %v83
  %v964 = vunpack.c.h.b16 %v83
  %v965 = vunpack.c.l.b16 %v84
  %v966 = vunpack.c.h.b16 %v84
  %v967 = vunpack.c.l.b16 %v85
  %v968 = vunpack.c.h.b16 %v85
  %v969 = vunpack.c.l.b16 %v86
  %v970 = vunpack.c.h.b16 %v86
  %v971 = vunpack.c.l.b16 %v87
  %v972 = vunpack.c.h.b16 %v87
  %v973 = vunpack.c.l.b16 %v88
  %v974 = vunpack.c.h.b16 %v88
  %v975 = vunpack.c.l.b16 %v89
  %v976 = vunpack.c.h.b16 %v89
  %v977 = vunpack.c.l.b16 %v90
  %v978 = vunpack.c.h.b16 %v90
  %v979 = vunpack.c.l.b16 %v91
  %v980 = vunpack.c.h.b16 %v91
  %v981 = vunpack.c.l.b16 %v92
  %v982 = vunpack.c.h.b16 %v92
  %v983 = vunpack.c.l.b16 %v93
  %v984 = vunpack.c.h.b16 %v93
  %v985 = vunpack.c.l.b16 %v94
  %v986 = vunpack.c.h.b16 %v94
  %v987 = vunpack.c.l.b16 %v95
  %v988 = vunpack.c.h.b16 %v95
  %v989 = vunpack.c.l.b16 %v96
  %v990 = vunpack.c.h.b16 %v96
  %v991 = vunpack.c.l.b16 %v97
  %v992 = vunpack.c.h.b16 %v97
  %v993 = vunpack.c.l.b16 %v98
  %v994 = vunpack.c.h.b16 %v98
  %v995 = vunpack.c.l.b16 %v99
  %v996 = vunpack.c.h.b16 %v99
  %v997 = vunpack.c.l.b16 %v100
  %v998 = vunpack.c.h.b16 %v100
  %v999 = vunpack.c.l.b16 %v101
  %v1000 = vunpack.c.h.b16 %v101
  %v1001 = vunpack.c.l.b16 %v102
  %v1002 = vunpack.c.h.b16 %v102
  %v1003 = vunpack.c.l.b16 %v103
  %v1004 = vunpack.c.h.b16 %v103
  %v1005 = vunpack.c.l.b16 %v104
  %v1006 = vunpack.c.h.b16 %v104
  %v1007 = vunpack.c.l.b16 %v105
  %v1008 = vunpack.c.h.b16 %v105
  %v1009 = vunpack.c.l.b16 %v106
  %v1010 = vunpack.c.h.b16 %v106
  %v1011 = vunpack.c.l.b16 %v107
  %v1012 = vunpack.c.h.b16 %v107
  %v1013 = vunpack.c.l.b16 %v108
  %v1014 = vunpack.c.h.b16 %v108
  %v1015 = vunpack.c.l.b16 %v109
  %v1016 = vunpack.c.h.b16 %v109
  %v1017 = vunpack.c.l.b16 %v110
  %v1018 = vunpack.c.h.b16 %v110
  %v1019 = vunpack.c.l.b16 %v111
  %v1020 = vunpack.c.h.b16 %v111
  %v1021 = vunpack.c.l.b16 %v112
  %v1022 = vunpack.c.h.b16 %v112
  %v1023 = vunpack.c.l.b16 %v113
  %v1024 = vunpack.c.h.b16 %v113
  %v1025 = vunpack.c.l.b16 %v114
  %v1026 = vunpack.c.h.b16 %v114
  %v1027 = vunpack.c.l.b16 %v115
  %v1028 = vunpack.c.h.b16 %v115
  %v1029 = vunpack.c.l.b16 %v116
  %v1030 = vunpack.c.h.b16 %v116
  %v1031 = vunpack.c.l.b16 %v117
  %v1032 = vunpack.c.h.b16 %v117
  %v1033 = vunpack.c.l.b16 %v118
  %v1034 = vunpack.c.h.b16 %v118
  %v1035 = vunpack.c.l.b16 %v119
  %v1036 = vunpack.c.h.b16 %v119
  %v1037 = vunpack.c.l.b16 %v120
  %v1038 = vunpack.c.h.b16 %v120
  %v1039 = vunpack.c.l.b16 %v121
  %v1040 = vunpack.c.h.b16 %v121
  %v1041 = vunpack.c.l.b16 %v122
  %v1042 = vunpack.c.h.b16 %v122
  %v1043 = vunpack.c.l.b16 %v123
  %v1044 = vunpack.c.h.b16 %v123
  %v1045 = vunpack.c.l.b16 %v124
  %v1046 = vunpack.c.h.b16 %v124
  %v1047 = vunpack.c.l.b16 %v125
  %v1048 = vunpack.c.h.b16 %v125
  %v1049 = vunpack.c.l.b16 %v126
  %v1050 = vunpack.c.h.b16 %v126
  %v1051 = vunpack.c.l.b16 %v127
  %v1052 = vunpack.c.h.b16 %v127
  %v1053 = vunpack.c.l.b16 %v128
  %v1054 = vunpack.c.h.b16 %v128
  %v1055 = vunpack.c.l.b16 %v129
  %v1056 = vunpack.c.h.b16 %v129
  %v1057 = vunpack.c.l.b16 %v130
  %v1058 = vunpack.c.h.b16 %v130
  %v1059 = vunpack.c.l.b16 %v131
  %v1060 = vunpack.c.h.b16 %v131
  %v1061 = vunpack.c.l.b16 %v132
  %v1062 = vunpack.c.h.b16 %v132
  %v1063 = vunpack.c.l.b16 %v133
  %v1064 = vunpack.c.h.b16 %v133
  %v1065 = vunpack.c.l.b16 %v134
  %v1066 = vunpack.c.h.b16 %v134
  %v1067 = vunpack.c.l.b16 %v135
  %v1068 = vunpack.c.h.b16 %v135
  %v1069 = vunpack.c.l.b16 %v136
  %v1070 = vunpack.c.h.b16 %v136
  %v1071 = vunpack.c.l.b16 %v137
  %v1072 = vunpack.c.h.b16 %v137
  %v1073 = vunpack.c.l.b16 %v138
  %v1074 = vunpack.c.h.b16 %v138
  %v1075 = vunpack.c.l.b16 %v139
  %v1076 = vunpack.c.h.b16 %v139
  %v1077 = vunpack.c.l.b16 %v140
  %v1078 = vunpack.c.h.b16 %v140
  %v1079 = vunpack.c.l.b16 %v141
  %v1080 = vunpack.c.h.b16 %v141
  %v1081 = vunpack.c.l.b16 %v142
  %v1082 = vunpack.c.h.b16 %v142
  %v1083 = vunpack.c.l.b16 %v143
  %v1084 = vunpack.c.h.b16 %v143
  %v1085 = vunpack.c.l.b16 %v144
  %v1086 = vunpack.c.h.b16 %v144
  %v1087 = vunpack.c.l.b16 %v145
  %v1088 = vunpack.c.h.b16 %v145
  %v1089 = vunpack.c.l.b16 %v146
  %v1090 = vunpack.c.h.b16 %v146
  %v1091 = vunpack.c.l.b16 %v147
  %v1092 = vunpack.c.h.b16 %v147
  %v1093 = vunpack.c.l.b16 %v148
  %v1094 = vunpack.c.h.b16 %v148
  %v1095 = vunpack.c.l.b16 %v149
  %v1096 = vunpack.c.h.b16 %v149
  %v1097 = vunpack.c.l.b16 %v150
  %v1098 = vunpack.c.h.b16 %v150
  %v1099 = vunpack.c.l.b16 %v151
  %v1100 = vunpack.c.h.b16 %v151
  %v1101 = vunpack.c.l.b16 %v152
  %v1102 = vunpack.c.h.b16 %v152
  %v1103 = vunpack.c.l.b16 %v153
  %v1104 = vunpack.c.h.b16 %v153
  %v1105 = vunpack.c.l.b16 %v154
  %v1106 = vunpack.c.h.b16 %v154
  %v1107 = vunpack.c.l.b16 %v155
  %v1108 = vunpack.c.h.b16 %v155
  %v1109 = vunpack.c.l.b16 %v156
  %v1110 = vunpack.c.h.b16 %v156
  %v1111 = vunpack.c.l.b16 %v157
  %v1112 = vunpack.c.h.b16 %v157
  %v1113 = vunpack.c.l.b16 %v158
  %v1114 = vunpack.c.h.b16 %v158
  %v1115 = vunpack.c.l.b16 %v159
  %v1116 = vunpack.c.h.b16 %v159
  %v1117 = vunpack.c.l.b16 %v160
  %v1118 = vunpack.c.h.b16 %v160
  %v1119 = vunpack.c.l.b16 %v161
  %v1120 = vunpack.c.h.b16 %v161
  %v1121 = vunpack.c.l.b16 %v162
  %v1122 = vunpack.c.h.b16 %v162
  %v1123 = vunpack.c.l.b16 %v163
  %v1124 = vunpack.c.h.b16 %v163
  %v1125 = vunpack.c.l.b16 %v164
  %v1126 = vunpack.c.h.b16 %v164
  %v1127 = vunpack.c.l.b16 %v165
  %v1128 = vunpack.c.h.b16 %v165
  %v1129 = vunpack.c.l.b16 %v166
  %v1130 = vunpack.c.h.b16 %v166
  %v1131 = vunpack.c.l.b16 %v167
  %v1132 = vunpack.c.h.b16 %v167
  %v1133 = vunpack.c.l.b16 %v168
  %v1134 = vunpack.c.h.b16 %v168
  %v1135 = vunpack.c.l.b16 %v169
  %v1136 = vunpack.c.h.b16 %v169
  %v1137 = vunpack.c.l.b16 %v170
  %v1138 = vunpack.c.h.b16 %v170
  %v1139 = vunpack.c.l.b16 %v171
  %v1140 = vunpack.c.h.b16 %v171
  %v1141 = vunpack.c.l.b16 %v172
  %v1142 = vunpack.c.h.b16 %v172
  %v1143 = vunpack.c.l.b16 %v173
  %v1144 = vunpack.c.h.b16 %v173
  %v1145 = vunpack.c.l.b16 %v174
  %v1146 = vunpack.c.h.b16 %v174
  %v1147 = vunpack.c.l.b16 %v175
  %v1148 = vunpack.c.h.b16 %v175
  %v1149 = vunpack.c.l.b16 %v176
  %v1150 = vunpack.c.h.b16 %v176
  %v1151 = vunpack.c.l.b16 %v177
  %v1152 = vunpack.c.h.b16 %v177
  %v1153 = vunpack.c.l.b16 %v178
  %v1154 = vunpack.c.h.b16 %v178
  %v1155 = vunpack.c.l.b16 %v179
  %v1156 = vunpack.c.h.b16 %v179
  %v1157 = vunpack.c.l.b16 %v180
  %v1158 = vunpack.c.h.b16 %v180
  %v1159 = vunpack.c.l.b16 %v181
  %v1160 = vunpack.c.h.b16 %v181
  %v1161 = vunpack.c.l.b16 %v182
  %v1162 = vunpack.c.h.b16 %v182
  %v1163 = vunpack.c.l.b16 %v183
  %v1164 = vunpack.c.h.b16 %v183
  %v1165 = vunpack.c.l.b16 %v184
  %v1166 = vunpack.c.h.b16 %v184
  %v1167 = vunpack.c.l.b16 %v185
  %v1168 = vunpack.c.h.b16 %v185
  %v1169 = vunpack.c.l.b16 %v186
  %v1170 = vunpack.c.h.b16 %v186
  %v1171 = vunpack.c.l.b16 %v187
  %v1172 = vunpack.c.h.b16 %v187
  %v1173 = vunpack.c.l.b16 %v188
  %v1174 = vunpack.c.h.b16 %v188
  %v1175 = vunpack.c.l.b16 %v189
  %v1176 = vunpack.c.h.b16 %v189
  %v1177 = vunpack.c.l.b16 %v190
  %v1178 = vunpack.c.h.b16 %v190
  %v1179 = vunpack.c.l.b16 %v191
  %v1180 = vunpack.c.h.b16 %v191
  %v1181 = vunpack.c.l.b16 %v192
  %v1182 = vunpack.c.h.b16 %v192
  %v1183 = vunpack.c.l.b16 %v193
  %v1184 = vunpack.c.h.b16 %v193
  %v1185 = vunpack.c.l.b16 %v194
  %v1186 = vunpack.c.h.b16 %v194
  %v1187 = vunpack.c.l.b16 %v195
  %v1188 = vunpack.c.h.b16 %v195
  %v1189 = vunpack.c.l.b16 %v196
  %v1190 = vunpack.c.h.b16 %v196
  %v1191 = vunpack.c.l.b16 %v197
  %v1192 = vunpack.c.h.b16 %v197
  %v1193 = vunpack.c.l.b16 %v198
  %v1194 = vunpack.c.h.b16 %v198
  %v1195 = vunpack.c.l.b16 %v199
  %v1196 = vunpack.c.h.b16 %v199
  %v1197 = vunpack.c.l.b16 %v200
  %v1198 = vunpack.c.h.b16 %v200
  %v1199 = vunpack.c.l.b16 %v201
  %v1200 = vunpack.c.h.b16 %v201
  %v1201 = vunpack.c.l.b16 %v202
  %v1202 = vunpack.c.h.b16 %v202
  %v1203 = vunpack.c.l.b16 %v203
  %v1204 = vunpack.c.h.b16 %v203
  %v1205 = vunpack.c.l.b16 %v204
  %v1206 = vunpack.c.h.b16 %v204
  %v1207 = vunpack.c.l.b16 %v205
  %v1208 = vunpack.c.h.b16 %v205
  %v1209 = vunpack.c.l.b16 %v206
  %v1210 = vunpack.c.h.b16 %v206
  %v1211 = vunpack.c.l.b16 %v207
  %v1212 = vunpack.c.h.b16 %v207
  %v1213 = vunpack.c.l.b16 %v208
  %v1214 = vunpack.c.h.b16 %v208
  %v1215 = vunpack.c.l.b16 %v209
  %v1216 = vunpack.c.h.b16 %v209
  %v1217 = vunpack.c.l.b16 %v210
  %v1218 = vunpack.c.h.b16 %v210
  %v1219 = vunpack.c.l.b16 %v211
  %v1220 = vunpack.c.h.b16 %v211
  %v1221 = vunpack.c.l.b16 %v212
  %v1222 = vunpack.c.h.b16 %v212
  %v1223 = vunpack.c.l.b16 %v213
  %v1224 = vunpack.c.h.b16 %v213
  %v1225 = vunpack.c.l.b16 %v214
  %v1226 = vunpack.c.h.b16 %v214
  %v1227 = vunpack.c.l.b16 %v215
  %v1228 = vunpack.c.h.b16 %v215
  %v1229 = vunpack.c.l.b16 %v216
  %v1230 = vunpack.c.h.b16 %v216
  %v1231 = vunpack.c.l.b16 %v217
  %v1232 = vunpack.c.h.b16 %v217
  %v1233 = vunpack.c.l.b16 %v218
  %v1234 = vunpack.c.h.b16 %v218
  %v1235 = vunpack.c.l.b16 %v219
  %v1236 = vunpack.c.h.b16 %v219
  %v1237 = vunpack.c.l.b16 %v220
  %v1238 = vunpack.c.h.b16 %v220
  %v1239 = vunpack.c.l.b16 %v221
  %v1240 = vunpack.c.h.b16 %v221
  %v1241 = vunpack.c.l.b16 %v222
  %v1242 = vunpack.c.h.b16 %v222
  %v1243 = vunpack.c.l.b16 %v223
  %v1244 = vunpack.c.h.b16 %v223
  %v1245 = vunpack.c.l.b16 %v224
  %v1246 = vunpack.c.h.b16 %v224
  %v1247 = vunpack.c.l.b16 %v225
  %v1248 = vunpack.c.h.b16 %v225
  %v1249 = vunpack.c.l.b16 %v226
  %v1250 = vunpack.c.h.b16 %v226
  %v1251 = vunpack.c.l.b16 %v227
  %v1252 = vunpack.c.h.b16 %v227
  %v1253 = vunpack.c.l.b16 %v228
  %v1254 = vunpack.c.h.b16 %v228
  %v1255 = vunpack.c.l.b16 %v229
  %v1256 = vunpack.c.h.b16 %v229
  %v1257 = vunpack.c.l.b16 %v230
  %v1258 = vunpack.c.h.b16 %v230
  %v1259 = vunpack.c.l.b16 %v231
  %v1260 = vunpack.c.h.b16 %v231
  %v1261 = vunpack.c.l.b16 %v232
  %v1262 = vunpack.c.h.b16 %v232
  %v1263 = vunpack.c.l.b16 %v233
  %v1264 = vunpack.c.h.b16 %v233
  %v1265 = vunpack.c.l.b16 %v234
  %v1266 = vunpack.c.h.b16 %v234
  %v1267 = vunpack.c.l.b16 %v235
  %v1268 = vunpack.c.h.b16 %v235
  %v1269 = vunpack.c.l.b16 %v236
  %v1270 = vunpack.c.h.b16 %v236
  %v1271 = vunpack.c.l.b16 %v237
  %v1272 = vunpack.c.h.b16 %v237
  %v1273 = vunpack.c.l.b16 %v238
  %v1274 = vunpack.c.h.b16 %v238
  %v1275 = vunpack.c.l.b16 %v239
  %v1276 = vunpack.c.h.b16 %v239
  %v1277 = vunpack.c.l.b16 %v240
  %v1278 = vunpack.c.h.b16 %v240
  %v1279 = vunpack.c.l.b16 %v241
  %v1280 = vunpack.c.h.b16 %v241
  %v1281 = vunpack.c.l.b16 %v242
  %v1282 = vunpack.c.h.b16 %v242
  %v1283 = vunpack.c.l.b16 %v243
  %v1284 = vunpack.c.h.b16 %v243
  %v1285 = vunpack.c.l.b16 %v244
  %v1286 = vunpack.c.h.b16 %v244
  %v1287 = vunpack.c.l.b16 %v245
  %v1288 = vunpack.c.h.b16 %v245
  %v1289 = vunpack.c.l.b16 %v246
  %v1290 = vunpack.c.h.b16 %v246
  %v1291 = vunpack.c.l.b16 %v247
  %v1292 = vunpack.c.h.b16 %v247
  %v1293 = vunpack.c.l.b16 %v248
  %v1294 = vunpack.c.h.b16 %v248
  %v1295 = vunpack.c.l.b16 %v249
  %v1296 = vunpack.c.h.b16 %v249
  %v1297 = vunpack.c.l.b16 %v250
  %v1298 = vunpack.c.h.b16 %v250
  %v1299 = vunpack.c.l.b16 %v251
  %v1300 = vunpack.c.h.b16 %v251
  %v1301 = vunpack.c.l.b16 %v252
  %v1302 = vunpack.c.h.b16 %v252
  %v1303 = vunpack.c.l.b16 %v253
  %v1304 = vunpack.c.h.b16 %v253
  %v1305 = vunpack.c.l.b16 %v254
  %v1306 = vunpack.c.h.b16 %v254
  %v1307 = vunpack.c.l.b16 %v255
  %v1308 = vunpack.c.h.b16 %v255
  %v1309 = vunpack.c.l.b16 %v256
  %v1310 = vunpack.c.h.b16 %v256
  %v1311 = vunpack.c.l.b16 %v257
  %v1312 = vunpack.c.h.b16 %v257
  %v1313 = vunpack.c.l.b16 %v258
  %v1314 = vunpack.c.h.b16 %v258
  %v1315 = vunpack.c.l.b16 %v259
  %v1316 = vunpack.c.h.b16 %v259
  %v1317 = vunpack.c.l.b16 %v260
  %v1318 = vunpack.c.h.b16 %v260
  %v1319 = vunpack.c.l.b16 %v261
  %v1320 = vunpack.c.h.b16 %v261
  %v1321 = vunpack.c.l.b16 %v262
  %v1322 = vunpack.c.h.b16 %v262
  %v1323 = vunpack.c.l.b16 %v263
  %v1324 = vunpack.c.h.b16 %v263
  %v1325 = vunpack.c.l.b16 %v264
  %v1326 = vunpack.c.h.b16 %v264
  %v1327 = vunpack.c.l.b16 %v265
  %v1328 = vunpack.c.h.b16 %v265
  %v1329 = vunpack.c.l.b16 %v266
  %v1330 = vunpack.c.h.b16 %v266
  %v1331 = vunpack.c.l.b16 %v267
  %v1332 = vunpack.c.h.b16 %v267
  %v1333 = vunpack.c.l.b16 %v268
  %v1334 = vunpack.c.h.b16 %v268
  %v1335 = vunpack.c.l.b16 %v269
  %v1336 = vunpack.c.h.b16 %v269
  %v1337 = vunpack.c.l.b16 %v270
  %v1338 = vunpack.c.h.b16 %v270
  %v1339 = vunpack.c.l.b16 %v271
  %v1340 = vunpack.c.h.b16 %v271
  %v1341 = vunpack.c.l.b16 %v272
  %v1342 = vunpack.c.h.b16 %v272
  %v1343 = vunpack.c.l.b16 %v273
  %v1344 = vunpack.c.h.b16 %v273
  %v1345 = vunpack.c.l.b16 %v274
  %v1346 = vunpack.c.h.b16 %v274
  %v1347 = vunpack.c.l.b16 %v275
  %v1348 = vunpack.c.h.b16 %v275
  %v1349 = vunpack.c.l.b16 %v276
  %v1350 = vunpack.c.h.b16 %v276
  %v1351 = vunpack.c.l.b16 %v277
  %v1352 = vunpack.c.h.b16 %v277
  %v1353 = vunpack.c.l.b16 %v278
  %v1354 = vunpack.c.h.b16 %v278
  %v1355 = vunpack.c.l.b16 %v279
  %v1356 = vunpack.c.h.b16 %v279
  %v1357 = vunpack.c.l.b16 %v280
  %v1358 = vunpack.c.h.b16 %v280
  %v1359 = vunpack.c.l.b16 %v281
  %v1360 = vunpack.c.h.b16 %v281
  %v1361 = vunpack.c.l.b16 %v282
  %v1362 = vunpack.c.h.b16 %v282
  %v1363 = vunpack.c.l.b16 %v283
  %v1364 = vunpack.c.h.b16 %v283
  %v1365 = vunpack.c.l.b16 %v284
  %v1366 = vunpack.c.h.b16 %v284
  %v1367 = vunpack.c.l.b16 %v285
  %v1368 = vunpack.c.h.b16 %v285
  %v1369 = vunpack.c.l.b16 %v286
  %v1370 = vunpack.c.h.b16 %v286
  %v1371 = vunpack.c.l.b16 %v287
  %v1372 = vunpack.c.h.b16 %v287
  %v1373 = vunpack.c.l.b16 %v288
  %v1374 = vunpack.c.h.b16 %v288
  %v1375 = vunpack.c.l.b16 %v289
  %v1376 = vunpack.c.h.b16 %v289
  %v1377 = vunpack.c.l.b16 %v290
  %v1378 = vunpack.c.h.b16 %v290
  %v1379 = vunpack.c.l.b16 %v291
  %v1380 = vunpack.c.h.b16 %v291
  %v1381 = vunpack.c.l.b16 %v292
  %v1382 = vunpack.c.h.b16 %v292
  %v1383 = vunpack.c.l.b16 %v293
  %v1384 = vunpack.c.h.b16 %v293
  %v1385 = vunpack.c.l.b16 %v294
  %v1386 = vunpack.c.h.b16 %v294
  %v1387 = vunpack.c.l.b16 %v295
  %v1388 = vunpack.c.h.b16 %v295
  %v1389 = vunpack.c.l.b16 %v296
  %v1390 = vunpack.c.h.b16 %v296
  %v1391 = vunpack.c.l.b16 %v297
  %v1392 = vunpack.c.h.b16 %v297
  %v1393 = vunpack.c.l.b16 %v298
  %v1394 = vunpack.c.h.b16 %v298
  %v1395 = vunpack.c.l.b16 %v299
  %v1396 = vunpack.c.h.b16 %v299
  %v1397 = vunpack.c.l.b16 %v300
  %v1398 = vunpack.c.h.b16 %v300
  %v1399 = vunpack.c.l.b16 %v301
  %v1400 = vunpack.c.h.b16 %v301
  %v1401 = vunpack.c.l.b16 %v302
  %v1402 = vunpack.c.h.b16 %v302
  %v1403 = vunpack.c.l.b16 %v303
  %v1404 = vunpack.c.h.b16 %v303
  %v1405 = vunpack.c.l.b16 %v304
  %v1406 = vunpack.c.h.b16 %v304
  %v1407 = vunpack.c.l.b16 %v305
  %v1408 = vunpack.c.h.b16 %v305
  %v1409 = vunpack.c.l.b16 %v306
  %v1410 = vunpack.c.h.b16 %v306
  %v1411 = vunpack.c.l.b16 %v307
  %v1412 = vunpack.c.h.b16 %v307
  %v1413 = vunpack.c.l.b16 %v308
  %v1414 = vunpack.c.h.b16 %v308
  %v1415 = vpack.c.b16 %v845, %v839
  %v1416 = vpack.c.b16 %v846, %v840
  %v1417 = vpack.c.b16 %v847, %v841
  %v1418 = vpack.c.b16 %v848, %v842
  %v1419 = vpack.c.b16 %v849, %v843
  %v1420 = vpack.c.b16 %v850, %v844
  %v1421 = vpack.c.b16 %v857, %v851
  %v1422 = vpack.c.b16 %v858, %v852
  %v1423 = vpack.c.b16 %v859, %v853
  %v1424 = vpack.c.b16 %v860, %v854
  %v1425 = vpack.c.b16 %v861, %v855
  %v1426 = vpack.c.b16 %v862, %v856
  %v1427 = vpack.c.b16 %v869, %v863
  %v1428 = vpack.c.b16 %v870, %v864
  %v1429 = vpack.c.b16 %v871, %v865
  %v1430 = vpack.c.b16 %v872, %v866
  %v1431 = vpack.c.b16 %v873, %v867
  %v1432 = vpack.c.b16 %v874, %v868
  %v1433 = vpack.c.b16 %v881, %v875
  %v1434 = vpack.c.b16 %v882, %v876
  %v1435 = vpack.c.b16 %v883, %v877
  %v1436 = vpack.c.b16 %v884, %v878
  %v1437 = vpack.c.b16 %v885, %v879
  %v1438 = vpack.c.b16 %v886, %v880
  %v1439 = vpack.c.b16 %v893, %v887
  %v1440 = vpack.c.b16 %v894, %v888
  %v1441 = vpack.c.b16 %v895, %v889
  %v1442 = vpack.c.b16 %v896, %v890
  %v1443 = vpack.c.b16 %v897, %v891
  %v1444 = vpack.c.b16 %v898, %v892
  %v1445 = vpack.c.b16 %v905, %v899
  %v1446 = vpack.c.b16 %v906, %v900
  %v1447 = vpack.c.b16 %v907, %v901
  %v1448 = vpack.c.b16 %v908, %v902
  %v1449 = vpack.c.b16 %v909, %v903
  %v1450 = vpack.c.b16 %v910, %v904
  %v1451 = vpack.c.b16 %v917, %v911
  %v1452 = vpack.c.b16 %v918, %v912
  %v1453 = vpack.c.b16 %v919, %v913
  %v1454 = vpack.c.b16 %v920, %v914
  %v1455 = vpack.c.b16 %v921, %v915
  %v1456 = vpack.c.b16 %v922, %v916
  %v1457 = vpack.c.b16 %v929, %v923
  %v1458 = vpack.c.b16 %v930, %v924
  %v1459 = vpack.c.b16 %v931, %v925
  %v1460 = vpack.c.b16 %v932, %v926
  %v1461 = vpack.c.b16 %v933, %v927
  %v1462 = vpack.c.b16 %v934, %v928
  %v1463 = vpack.c.b16 %v941, %v935
  %v1464 = vpack.c.b16 %v942, %v936
  %v1465 = vpack.c.b16 %v943, %v937
  %v1466 = vpack.c.b16 %v944, %v938
  %v1467 = vpack.c.b16 %v945, %v939
  %v1468 = vpack.c.b16 %v946, %v940
  %v1469 = vpack.c.b16 %v953, %v947
  %v1470 = vpack.c.b16 %v954, %v948
  %v1471 = vpack.c.b16 %v955, %v949
  %v1472 = vpack.c.b16 %v956, %v950
  %v1473 = vpack.c.b16 %v957, %v951
  %v1474 = vpack.c.b16 %v958, %v952
  %v1475 = vpack.c.b16 %v965, %v959
  %v1476 = vpack.c.b16 %v966, %v960
  %v1477 = vpack.c.b16 %v967, %v961
  %v1478 = vpack.c.b16 %v968, %v962
  %v1479 = vpack.c.b16 %v969, %v963
  %v1480 = vpack.c.b16 %v970, %v964
  %v1481 = vpack.c.b16 %v977, %v971
  %v1482 = vpack.c.b16 %v978, %v972
  %v1483 = vpack.c.b16 %v979, %v973
  %v1484 = vpack.c.b16 %v980, %v974
  %v1485 = vpack.c.b16 %v981, %v975
  %v1486 = vpack.c.b16 %v982, %v976
  %v1487 = vpack.c.b16 %v989, %v983
  %v1488 = vpack.c.b16 %v990, %v984
  %v1489 = vpack.c.b16 %v991, %v985
  %v1490 = vpack.c.b16 %v992, %v986
  %v1491 = vpack.c.b16 %v993, %v987
  %v1492 = vpack.c.b16 %v994, %v988
  %v1493 = vpack.c.b16 %v1001, %v995
  %v1494 = vpack.c.b16 %v1002, %v996
  %v1495 = vpack.c.b16 %v1003, %v997
  %v1496 = vpack.c.b16 %v1004, %v998
  %v1497 = vpack.c.b16 %v1005, %v999
  %v1498 = vpack.c.b16 %v1006, %v1000
  %v1499 = vpack.c.b16 %v1013, %v1007
  %v1500 = vpack.c.b16 %v1014, %v1008
  %v1501 = vpack.c.b16 %v1015, %v1009
  %v1502 = vpack.c.b16 %v1016, %v1010
  %v1503 = vpack.c.b16 %v1017, %v1011
  %v1504 = vpack.c.b16 %v1018, %v1012
  %v1505 = vpack.c.b16 %v1025, %v1019
  %v1506 = vpack.c.b16 %v1026, %v1020
  %v1507 = vpack.c.b16 %v1027, %v1021
  %v1508 = vpack.c.b16 %v1028, %v1022
  %v1509 = vpack.c.b16 %v1029, %v1023
  %v1510 = vpack.c.b16 %v1030, %v1024
  %v1511 = vpack.c.b16 %v1037, %v1031
  %v1512 = vpack.c.b16 %v1038, %v1032
  %v1513 = vpack.c.b16 %v1039, %v1033
  %v1514 = vpack.c.b16 %v1040, %v1034
  %v1515 = vpack.c.b16 %v1041, %v1035
  %v1516 = vpack.c.b16 %v1042, %v1036
  %v1517 = vpack.c.b16 %v1049, %v1043
  %v1518 = vpack.c.b16 %v1050, %v1044
  %v1519 = vpack.c.b16 %v1051, %v1045
  %v1520 = vpack.c.b16 %v1052, %v1046
  %v1521 = vpack.c.b16 %v1053, %v1047
  %v1522 = vpack.c.b16 %v1054, %v1048
  %v1523 = vpack.c.b16 %v1061, %v1055
  %v1524 = vpack.c.b16 %v1062, %v1056
  %v1525 = vpack.c.b16 %v1063, %v1057
  %v1526 = vpack.c.b16 %v1064, %v1058
  %v1527 = vpack.c.b16 %v1065, %v1059
  %v1528 = vpack.c.b16 %v1066, %v1060
  %v1529 = vpack.c.b16 %v1073, %v1067
  %v1530 = vpack.c.b16 %v1074, %v1068
  %v1531 = vpack.c.b16 %v1075, %v1069
  %v1532 = vpack.c.b16 %v1076, %v1070
  %v1533 = vpack.c.b16 %v1077, %v1071
  %v1534 = vpack.c.b16 %v1078, %v1072
  %v1535 = vpack.c.b16 %v1085, %v1079
  %v1536 = vpack.c.b16 %v1086, %v1080
  %v1537 = vpack.c.b16 %v1087, %v1081
  %v1538 = vpack.c.b16 %v1088, %v1082
  %v1539 = vpack.c.b16 %v1089, %v1083
  %v1540 = vpack.c.b16 %v1090, %v1084
  %v1541 = vpack.c.b16 %v1097, %v1091
  %v1542 = vpack.c.b16 %v1098, %v1092
  %v1543 = vpack.c.b16 %v1099, %v1093
  %v1544 = vpack.c.b16 %v1100, %v1094
  %v1545 = vpack.c.b16 %v1101, %v1095
  %v1546 = vpack.c.b16 %v1102, %v1096
  %v1547 = vpack.c.b16 %v1109, %v1103
  %v1548 = vpack.c.b16 %v1110, %v1104
  %v1549 = vpack.c.b16 %v1111, %v1105
  %v1550 = vpack.c.b16 %v1112, %v1106
  %v1551 = vpack.c.b16 %v1113, %v1107
  %v1552 = vpack.c.b16 %v1114, %v1108
  %v1553 = vpack.c.b16 %v1121, %v1115
  %v1554 = vpack.c.b16 %v1122, %v1116
  %v1555 = vpack.c.b16 %v1123, %v1117
  %v1556 = vpack.c.b16 %v1124, %v1118
  %v1557 = vpack.c.b16 %v1125, %v1119
  %v1558 = vpack.c.b16 %v1126, %v1120
  %v1559 = vpack.c.b16 %v1133, %v1127
  %v1560 = vpack.c.b16 %v1134, %v1128
  %v1561 = vpack.c.b16 %v1135, %v1129
  %v1562 = vpack.c.b16 %v1136, %v1130
  %v1563 = vpack.c.b16 %v1137, %v1131
  %v1564 = vpack.c.b16 %v1138, %v1132
  %v1565 = vpack.c.b16 %v1145, %v1139
  %v1566 = vpack.c.b16 %v1146, %v1140
  %v1567 = vpack.c.b16 %v1147, %v1141
  %v1568 = vpack.c.b16 %v1148, %v1142
  %v1569 = vpack.c.b16 %v1149, %v1143
  %v1570 = vpack.c.b16 %v1150, %v1144
  %v1571 = vpack.c.b16 %v1157, %v1151
  %v1572 = vpack.c.b16 %v1158, %v1152
  %v1573 = vpack.c.b16 %v1159, %v1153
  %v1574 = vpack.c.b16 %v1160, %v1154
  %v1575 = vpack.c.b16 %v1161, %v1155
  %v1576 = vpack.c.b16 %v1162, %v1156
  %v1577 = vpack.c.b16 %v1169, %v1163
  %v1578 = vpack.c.b16 %v1170, %v1164
  %v1579 = vpack.c.b16 %v1171, %v1165
  %v1580 = vpack.c.b16 %v1172, %v1166
  %v1581 = vpack.c.b16 %v1173, %v1167
  %v1582 = vpack.c.b16 %v1174, %v1168
  %v1583 = vpack.c.b16 %v1181, %v1175
  %v1584 = vpack.c.b16 %v1182, %v1176
  %v1585 = vpack.c.b16 %v1183, %v1177
  %v1586 = vpack.c.b16 %v1184, %v1178
  %v1587 = vpack.c.b16 %v1185, %v1179
  %v1588 = vpack.c.b16 %v1186, %v1180
  %v1589 = vpack.c.b16 %v1193, %v1187
  %v1590 = vpack.c.b16 %v1194, %v1188
  %v1591 = vpack.c.b16 %v1195, %v1189
  %v1592 = vpack.c.b16 %v1196, %v1190
  %v1593 = vpack.c.b16 %v1197, %v1191
  %v1594 = vpack.c.b16 %v1198, %v1192
  %v1595 = vpack.c.b16 %v1205, %v1199
  %v1596 = vpack.c.b16 %v1206, %v1200
  %v1597 = vpack.c.b16 %v1207, %v1201
  %v1598 = vpack.c.b16 %v1208, %v1202
  %v1599 = vpack.c.b16 %v1209, %v1203
  %v1600 = vpack.c.b16 %v1210, %v1204
  %v1601 = vpack.c.b16 %v1217, %v1211
  %v1602 = vpack.c.b16 %v1218, %v1212
  %v1603 = vpack.c.b16 %v1219, %v1213
  %v1604 = vpack.c.b16 %v1220, %v1214
  %v1605 = vpack.c.b16 %v1221, %v1215
  %v1606 = vpack.c.b16 %v1222, %v1216
  %v1607 = vpack.c.b16 %v1229, %v1223
  %v1608 = vpack.c.b16 %v1230, %v1224
  %v1609 = vpack.c.b16 %v1231, %v1225
  %v1610 = vpack.c.b16 %v1232, %v1226
  %v1611 = vpack.c.b16 %v1233, %v1227
  %v1612 = vpack.c.b16 %v1234, %v1228
  %v1613 = vpack.c.b16 %v1241, %v1235
  %v1614 = vpack.c.b16 %v1242, %v1236
  %v1615 = vpack.c.b16 %v1243, %v1237
  %v1616 = vpack.c.b16 %v1244, %v1238
  %v1617 = vpack.c.b16 %v1245, %v1239
  %v1618 = vpack.c.b16 %v1246, %v1240
  %v1619 = vpack.c.b16 %v1253, %v1247
  %v1620 = vpack.c.b16 %v1254, %v1248
  %v1621 = vpack.c.b16 %v1255, %v1249
  %v1622 = vpack.c.b16 %v1256, %v1250
  %v1623 = vpack.c.b16 %v1257, %v1251
  %v1624 = vpack.c.b16 %v1258, %v1252
  %v1625 = vpack.c.b16 %v1265, %v1259
  %v1626 = vpack.c.b16 %v1266, %v1260
  %v1627 = vpack.c.b16 %v1267, %v1261
  %v1628 = vpack.c.b16 %v1268, %v1262
  %v1629 = vpack.c.b16 %v1269, %v1263
  %v1630 = vpack.c.b16 %v1270, %v1264
  %v1631 = vpack.c.b16 %v1277, %v1271
  %v1632 = vpack.c.b16 %v1278, %v1272
  %v1633 = vpack.c.b16 %v1279, %v1273
  %v1634 = vpack.c.b16 %v1280, %v1274
  %v1635 = vpack.c.b16 %v1281, %v1275
  %v1636 = vpack.c.b16 %v1282, %v1276
  %v1637 = vpack.c.b16 %v1289, %v1283
  %v1638 = vpack.c.b16 %v1290, %v1284
  %v1639 = vpack.c.b16 %v1291, %v1285
  %v1640 = vpack.c.b16 %v1292, %v1286
  %v1641 = vpack.c.b16 %v1293, %v1287
  %v1642 = vpack.c.b16 %v1294, %v1288
  %v1643 = vpack.c.b16 %v1301, %v1295
  %v1644 = vpack.c.b16 %v1302, %v1296
  %v1645 = vpack.c.b16 %v1303, %v1297
  %v1646 = vpack.c.b16 %v1304, %v1298
  %v1647 = vpack.c.b16 %v1305, %v1299
  %v1648 = vpack.c.b16 %v1306, %v1300
  %v1649 = vpack.c.b16 %v1313, %v1307
  %v1650 = vpack.c.b16 %v1314, %v1308
  %v1651 = vpack.c.b16 %v1315, %v1309
  %v1652 = vpack.c.b16 %v1316, %v1310
  %v1653 = vpack.c.b16 %v1317, %v1311
  %v1654 = vpack.c.b16 %v1318, %v1312
  %v1655 = vpack.c.b16 %v1325, %v1319
  %v1656 = vpack.c.b16 %v1326, %v1320
  %v1657 = vpack.c.b16 %v1327, %v1321
  %v1658 = vpack.c.b16 %v1328, %v1322
  %v1659 = vpack.c.b16 %v1329, %v1323
  %v1660 = vpack.c.b16 %v1330, %v1324
  %v1661 = vpack.c.b16 %v1337, %v1331
  %v1662 = vpack.c.b16 %v1338, %v1332
  %v1663 = vpack.c.b16 %v1339, %v1333
  %v1664 = vpack.c.b16 %v1340, %v1334
  %v1665 = vpack.c.b16 %v1341, %v1335
  %v1666 = vpack.c.b16 %v1342, %v1336
  %v1667 = vpack.c.b16 %v1349, %v1343
  %v1668 = vpack.c.b16 %v1350, %v1344
  %v1669 = vpack.c.b16 %v1351, %v1345
  %v1670 = vpack.c.b16 %v1352, %v1346
  %v1671 = vpack.c.b16 %v1353, %v1347
  %v1672 = vpack.c.b16 %v1354, %v1348
  %v1673 = vpack.c.b16 %v1361, %v1355
  %v1674 = vpack.c.b16 %v1362, %v1356
  %v1675 = vpack.c.b16 %v1363, %v1357
  %v1676 = vpack.c.b16 %v1364, %v1358
  %v1677 = vpack.c.b16 %v1365, %v1359
  %v1678 = vpack.c.b16 %v1366, %v1360
  %v1679 = vpack.c.b16 %v1373, %v1367
  %v1680 = vpack.c.b16 %v1374, %v1368
  %v1681 = vpack.c.b16 %v1375, %v1369
  %v1682 = vpack.c.b16 %v1376, %v1370
  %v1683 = vpack.c.b16 %v1377, %v1371
  %v1684 = vpack.c.b16 %v1378, %v1372
  %v1685 = vpack.c.b16 %v1385, %v1379
  %v1686 = vpack.c.b16 %v1386, %v1380
  %v1687 = vpack.c.b16 %v1387, %v1381
  %v1688 = vpack.c.b16 %v1388, %v1382
  %v1689 = vpack.c.b16 %v1389, %v1383
  %v1690 = vpack.c.b16 %v1390, %v1384
  %v1691 = vpack.c.b16 %v1397, %v1391
  %v1692 = vpack.c.b16 %v1398, %v1392
  %v1693 = vpack.c.b16 %v1399, %v1393
  %v1694 = vpack.c.b16 %v1400, %v1394
  %v1695 = vpack.c.b16 %v1401, %v1395
  %v1696 = vpack.c.b16 %v1402, %v1396
  %v1697 = vpack.c.b16 %v1409, %v1403
  %v1698 = vpack.c.b16 %v1410, %v1404
  %v1699 = vpack.c.b16 %v1411, %v1405
  %v1700 = vpack.c.b16 %v1412, %v1406
  %v1701 = vpack.c.b16 %v1413, %v1407
  %v1702 = vpack.c.b16 %v1414, %v1408
  %1991 = vmatprep.subr.bf16.mxu0 %v1416
  %1992 = vmatpush1.bf16.msra.mxu0 %v1415
  %1993 = vmatprep.subr.bf16.mxu0 %v1422
  %1994 = vmatpush1.bf16.msra.mxu0 %v1421
  %1995 = vmatprep.subr.bf16.mxu0 %v1428
  %1996 = vmatpush1.bf16.msra.mxu0 %v1427
  %1997 = vmatprep.subr.bf16.mxu0 %v1434
  %1998 = vmatpush1.bf16.msra.mxu0 %v1433
  %1999 = vmatprep.subr.bf16.mxu0 %v1440
  %2000 = vmatpush1.bf16.msra.mxu0 %v1439
  %2001 = vmatprep.subr.bf16.mxu0 %v1446
  %2002 = vmatpush1.bf16.msra.mxu0 %v1445
  %2003 = vmatprep.subr.bf16.mxu0 %v1452
  %2004 = vmatpush1.bf16.msra.mxu0 %v1451
  %2005 = vmatprep.subr.bf16.mxu0 %v1458
  %2006 = vmatpush1.bf16.msra.mxu0 %v1457
  %2007 = vmatprep.subr.bf16.mxu0 %v1464
  %2008 = vmatpush1.bf16.msra.mxu0 %v1463
  %2009 = vmatprep.subr.bf16.mxu0 %v1470
  %2010 = vmatpush1.bf16.msra.mxu0 %v1469
  %2011 = vmatprep.subr.bf16.mxu0 %v1476
  %2012 = vmatpush1.bf16.msra.mxu0 %v1475
  %2013 = vmatprep.subr.bf16.mxu0 %v1482
  %2014 = vmatpush1.bf16.msra.mxu0 %v1481
  %2015 = vmatprep.subr.bf16.mxu0 %v1488
  %2016 = vmatpush1.bf16.msra.mxu0 %v1487
  %2017 = vmatprep.subr.bf16.mxu0 %v1494
  %2018 = vmatpush1.bf16.msra.mxu0 %v1493
  %2019 = vmatprep.subr.bf16.mxu0 %v1500
  %2020 = vmatpush1.bf16.msra.mxu0 %v1499
  %2021 = vmatprep.subr.bf16.mxu0 %v1506
  %2022 = vmatpush1.bf16.msra.mxu0 %v1505
  %2023 = vmatprep.mubr.bf16.mxu0 %v516
  %2024 = vmatmul.mubr.bf16.gmra.mrb[0].mxu0 %v515
  %v2025 = vpop.f32.mrb[0].mxu0
  %v2026 = vadd.f32 %v434, %v2025
  %v2027 = vpop.f32.mrb[0].mxu0
  %v2028 = vadd.f32 %v434, %v2027
  %v2029 = vpop.f32.mrb[0].mxu0
  %v2030 = vadd.f32 %v439, %v2029
  %v2031 = vpop.f32.mrb[0].mxu0
  %v2032 = vadd.f32 %v439, %v2031
  %2033 = vmatprep.mubr.bf16.mxu0 %v522
  %2034 = vmatmul.mubr.bf16.gmra.mrb[0].mxu0 %v521
  %v2035 = vpop.f32.mrb[0].mxu0
  %v2036 = vadd.f32 %v444, %v2035
  %v2037 = vpop.f32.mrb[0].mxu0
  %v2038 = vadd.f32 %v444, %v2037
  %v2039 = vpop.f32.mrb[0].mxu0
  %v2040 = vadd.f32 %v449, %v2039
  %v2041 = vpop.f32.mrb[0].mxu0
  %v2042 = vadd.f32 %v449, %v2041
  %2043 = vmatprep.mubr.bf16.mxu0 %v528
  %2044 = vmatmul.mubr.bf16.gmra.mrb[0].mxu0 %v527
  %v2045 = vpop.f32.mrb[0].mxu0
  %v2046 = vadd.f32 %v454, %v2045
  %v2047 = vpop.f32.mrb[0].mxu0
  %v2048 = vadd.f32 %v454, %v2047
  %v2049 = vpop.f32.mrb[0].mxu0
  %v2050 = vadd.f32 %v459, %v2049
  %v2051 = vpop.f32.mrb[0].mxu0
  %v2052 = vadd.f32 %v459, %v2051
  %2053 = vdwg.mxu0
  %2054 = vmatprep.subr.bf16.mxu0 %v1512
  %2055 = vmatpush1.bf16.msra.mxu0 %v1511
  %2056 = vmatprep.subr.bf16.mxu0 %v1518
  %2057 = vmatpush1.bf16.msra.mxu0 %v1517
  %2058 = vmatprep.subr.bf16.mxu0 %v1524
  %2059 = vmatpush1.bf16.msra.mxu0 %v1523
  %2060 = vmatprep.subr.bf16.mxu0 %v1530
  %2061 = vmatpush1.bf16.msra.mxu0 %v1529
  %2062 = vmatprep.subr.bf16.mxu0 %v1536
  %2063 = vmatpush1.bf16.msra.mxu0 %v1535
  %2064 = vmatprep.subr.bf16.mxu0 %v1542
  %2065 = vmatpush1.bf16.msra.mxu0 %v1541
  %2066 = vmatprep.subr.bf16.mxu0 %v1548
  %2067 = vmatpush1.bf16.msra.mxu0 %v1547
  %2068 = vmatprep.subr.bf16.mxu0 %v1554
  %2069 = vmatpush1.bf16.msra.mxu0 %v1553
  %2070 = vmatprep.subr.bf16.mxu0 %v1560
  %2071 = vmatpush1.bf16.msra.mxu0 %v1559
  %2072 = vmatprep.subr.bf16.mxu0 %v1566
  %2073 = vmatpush1.bf16.msra.mxu0 %v1565
  %2074 = vmatprep.subr.bf16.mxu0 %v1572
  %2075 = vmatpush1.bf16.msra.mxu0 %v1571
  %2076 = vmatprep.subr.bf16.mxu0 %v1578
  %2077 = vmatpush1.bf16.msra.mxu0 %v1577
  %2078 = vmatprep.subr.bf16.mxu0 %v1584
  %2079 = vmatpush1.bf16.msra.mxu0 %v1583
  %2080 = vmatprep.subr.bf16.mxu0 %v1590
  %2081 = vmatpush1.bf16.msra.mxu0 %v1589
  %2082 = vmatprep.subr.bf16.mxu0 %v1596
  %2083 = vmatpush1.bf16.msra.mxu0 %v1595
  %2084 = vmatprep.subr.bf16.mxu0 %v1602
  %2085 = vmatpush1.bf16.msra.mxu0 %v1601
  %2086 = vmatprep.mubr.bf16.mxu0 %v518
  %2087 = vmatmul.mubr.bf16.gmra.mrb[0].mxu0 %v517
  %v2088 = vpop.f32.mrb[0].mxu0
  %v2089 = vadd.f32 %v2026, %v2088
  %v2090 = vpop.f32.mrb[0].mxu0
  %v2091 = vadd.f32 %v2028, %v2090
  %v2092 = vpop.f32.mrb[0].mxu0
  %v2093 = vadd.f32 %v2030, %v2092
  %v2094 = vpop.f32.mrb[0].mxu0
  %v2095 = vadd.f32 %v2032, %v2094
  %2096 = vmatprep.mubr.bf16.mxu0 %v524
  %2097 = vmatmul.mubr.bf16.gmra.mrb[0].mxu0 %v523
  %v2098 = vpop.f32.mrb[0].mxu0
  %v2099 = vadd.f32 %v2036, %v2098
  %v2100 = vpop.f32.mrb[0].mxu0
  %v2101 = vadd.f32 %v2038, %v2100
  %v2102 = vpop.f32.mrb[0].mxu0
  %v2103 = vadd.f32 %v2040, %v2102
  %v2104 = vpop.f32.mrb[0].mxu0
  %v2105 = vadd.f32 %v2042, %v2104
  %2106 = vmatprep.mubr.bf16.mxu0 %v530
  %2107 = vmatmul.mubr.bf16.gmra.mrb[0].mxu0 %v529
  %v2108 = vpop.f32.mrb[0].mxu0
  %v2109 = vadd.f32 %v2046, %v2108
  %v2110 = vpop.f32.mrb[0].mxu0
  %v2111 = vadd.f32 %v2048, %v2110
  %v2112 = vpop.f32.mrb[0].mxu0
  %v2113 = vadd.f32 %v2050, %v2112
  %v2114 = vpop.f32.mrb[0].mxu0
  %v2115 = vadd.f32 %v2052, %v2114
  %2116 = vdwg.mxu0
  %2117 = vmatprep.subr.bf16.mxu0 %v1608
  %2118 = vmatpush1.bf16.msra.mxu0 %v1607
  %2119 = vmatprep.subr.bf16.mxu0 %v1614
  %2120 = vmatpush1.bf16.msra.mxu0 %v1613
  %2121 = vmatprep.subr.bf16.mxu0 %v1620
  %2122 = vmatpush1.bf16.msra.mxu0 %v1619
  %2123 = vmatprep.subr.bf16.mxu0 %v1626
  %2124 = vmatpush1.bf16.msra.mxu0 %v1625
  %2125 = vmatprep.subr.bf16.mxu0 %v1632
  %2126 = vmatpush1.bf16.msra.mxu0 %v1631
  %2127 = vmatprep.subr.bf16.mxu0 %v1638
  %2128 = vmatpush1.bf16.msra.mxu0 %v1637
  %2129 = vmatprep.subr.bf16.mxu0 %v1644
  %2130 = vmatpush1.bf16.msra.mxu0 %v1643
  %2131 = vmatprep.subr.bf16.mxu0 %v1650
  %2132 = vmatpush1.bf16.msra.mxu0 %v1649
  %2133 = vmatprep.subr.bf16.mxu0 %v1656
  %2134 = vmatpush1.bf16.msra.mxu0 %v1655
  %2135 = vmatprep.subr.bf16.mxu0 %v1662
  %2136 = vmatpush1.bf16.msra.mxu0 %v1661
  %2137 = vmatprep.subr.bf16.mxu0 %v1668
  %2138 = vmatpush1.bf16.msra.mxu0 %v1667
  %2139 = vmatprep.subr.bf16.mxu0 %v1674
  %2140 = vmatpush1.bf16.msra.mxu0 %v1673
  %2141 = vmatprep.subr.bf16.mxu0 %v1680
  %2142 = vmatpush1.bf16.msra.mxu0 %v1679
  %2143 = vmatprep.subr.bf16.mxu0 %v1686
  %2144 = vmatpush1.bf16.msra.mxu0 %v1685
  %2145 = vmatprep.subr.bf16.mxu0 %v1692
  %2146 = vmatpush1.bf16.msra.mxu0 %v1691
  %2147 = vmatprep.subr.bf16.mxu0 %v1698
  %2148 = vmatpush1.bf16.msra.mxu0 %v1697
  %2149 = vmatprep.mubr.bf16.mxu0 %v520
  %2150 = vmatmul.mubr.bf16.gmra.mrb[0].mxu0 %v519
  %v2151 = vpop.f32.mrb[0].mxu0
  %v2152 = vadd.f32 %v2089, %v2151
  %v2153 = vpop.f32.mrb[0].mxu0
  %v2154 = vadd.f32 %v2091, %v2153
  %v2155 = vpop.f32.mrb[0].mxu0
  %v2156 = vadd.f32 %v2093, %v2155
  %v2157 = vpop.f32.mrb[0].mxu0
  %v2158 = vadd.f32 %v2095, %v2157
  %2159 = vmatprep.mubr.bf16.mxu0 %v526
  %2160 = vmatmul.mubr.bf16.gmra.mrb[0].mxu0 %v525
  %v2161 = vpop.f32.mrb[0].mxu0
  %v2162 = vadd.f32 %v2099, %v2161
  %v2163 = vpop.f32.mrb[0].mxu0
  %v2164 = vadd.f32 %v2101, %v2163
  %v2165 = vpop.f32.mrb[0].mxu0
  %v2166 = vadd.f32 %v2103, %v2165
  %v2167 = vpop.f32.mrb[0].mxu0
  %v2168 = vadd.f32 %v2105, %v2167
  %2169 = vmatprep.mubr.bf16.mxu0 %v532
  %2170 = vmatmul.mubr.bf16.gmra.mrb[0].mxu0 %v531
  %v2171 = vpop.f32.mrb[0].mxu0
  %v2172 = vadd.f32 %v2109, %v2171
  %v2173 = vpop.f32.mrb[0].mxu0
  %v2174 = vadd.f32 %v2111, %v2173
  %v2175 = vpop.f32.mrb[0].mxu0
  %v2176 = vadd.f32 %v2113, %v2175
  %v2177 = vpop.f32.mrb[0].mxu0
  %v2178 = vadd.f32 %v2115, %v2177
  %2179 = vdwg.mxu0
  %2180 = vmatprep.subr.bf16.mxu0 %v1418
  %2181 = vmatpush1.bf16.msra.mxu0 %v1417
  %2182 = vmatprep.subr.bf16.mxu0 %v1424
  %2183 = vmatpush1.bf16.msra.mxu0 %v1423
  %2184 = vmatprep.subr.bf16.mxu0 %v1430
  %2185 = vmatpush1.bf16.msra.mxu0 %v1429
  %2186 = vmatprep.subr.bf16.mxu0 %v1436
  %2187 = vmatpush1.bf16.msra.mxu0 %v1435
  %2188 = vmatprep.subr.bf16.mxu0 %v1442
  %2189 = vmatpush1.bf16.msra.mxu0 %v1441
  %2190 = vmatprep.subr.bf16.mxu0 %v1448
  %2191 = vmatpush1.bf16.msra.mxu0 %v1447
  %2192 = vmatprep.subr.bf16.mxu0 %v1454
  %2193 = vmatpush1.bf16.msra.mxu0 %v1453
  %2194 = vmatprep.subr.bf16.mxu0 %v1460
  %2195 = vmatpush1.bf16.msra.mxu0 %v1459
  %2196 = vmatprep.subr.bf16.mxu0 %v1466
  %2197 = vmatpush1.bf16.msra.mxu0 %v1465
  %2198 = vmatprep.subr.bf16.mxu0 %v1472
  %2199 = vmatpush1.bf16.msra.mxu0 %v1471
  %2200 = vmatprep.subr.bf16.mxu0 %v1478
  %2201 = vmatpush1.bf16.msra.mxu0 %v1477
  %2202 = vmatprep.subr.bf16.mxu0 %v1484
  %2203 = vmatpush1.bf16.msra.mxu0 %v1483
  %2204 = vmatprep.subr.bf16.mxu0 %v1490
  %2205 = vmatpush1.bf16.msra.mxu0 %v1489
  %2206 = vmatprep.subr.bf16.mxu0 %v1496
  %2207 = vmatpush1.bf16.msra.mxu0 %v1495
  %2208 = vmatprep.subr.bf16.mxu0 %v1502
  %2209 = vmatpush1.bf16.msra.mxu0 %v1501
  %2210 = vmatprep.subr.bf16.mxu0 %v1508
  %2211 = vmatpush1.bf16.msra.mxu0 %v1507
  %2212 = vmatprep.mubr.bf16.mxu0 %v516
  %2213 = vmatmul.mubr.bf16.gmra.mrb[0].mxu0 %v515
  %v2214 = vpop.f32.mrb[0].mxu0
  %v2215 = vadd.f32 %v434, %v2214
  %v2216 = vpop.f32.mrb[0].mxu0
  %v2217 = vadd.f32 %v434, %v2216
  %v2218 = vpop.f32.mrb[0].mxu0
  %v2219 = vadd.f32 %v439, %v2218
  %v2220 = vpop.f32.mrb[0].mxu0
  %v2221 = vadd.f32 %v439, %v2220
  %2222 = vmatprep.mubr.bf16.mxu0 %v522
  %2223 = vmatmul.mubr.bf16.gmra.mrb[0].mxu0 %v521
  %v2224 = vpop.f32.mrb[0].mxu0
  %v2225 = vadd.f32 %v444, %v2224
  %v2226 = vpop.f32.mrb[0].mxu0
  %v2227 = vadd.f32 %v444, %v2226
  %v2228 = vpop.f32.mrb[0].mxu0
  %v2229 = vadd.f32 %v449, %v2228
  %v2230 = vpop.f32.mrb[0].mxu0
  %v2231 = vadd.f32 %v449, %v2230
  %2232 = vmatprep.mubr.bf16.mxu0 %v528
  %2233 = vmatmul.mubr.bf16.gmra.mrb[0].mxu0 %v527
  %v2234 = vpop.f32.mrb[0].mxu0
  %v2235 = vadd.f32 %v454, %v2234
  %v2236 = vpop.f32.mrb[0].mxu0
  %v2237 = vadd.f32 %v454, %v2236
  %v2238 = vpop.f32.mrb[0].mxu0
  %v2239 = vadd.f32 %v459, %v2238
  %v2240 = vpop.f32.mrb[0].mxu0
  %v2241 = vadd.f32 %v459, %v2240
  %2242 = vdwg.mxu0
  %2243 = vmatprep.subr.bf16.mxu0 %v1514
  %2244 = vmatpush1.bf16.msra.mxu0 %v1513
  %2245 = vmatprep.subr.bf16.mxu0 %v1520
  %2246 = vmatpush1.bf16.msra.mxu0 %v1519
  %2247 = vmatprep.subr.bf16.mxu0 %v1526
  %2248 = vmatpush1.bf16.msra.mxu0 %v1525
  %2249 = vmatprep.subr.bf16.mxu0 %v1532
  %2250 = vmatpush1.bf16.msra.mxu0 %v1531
  %2251 = vmatprep.subr.bf16.mxu0 %v1538
  %2252 = vmatpush1.bf16.msra.mxu0 %v1537
  %2253 = vmatprep.subr.bf16.mxu0 %v1544
  %2254 = vmatpush1.bf16.msra.mxu0 %v1543
  %2255 = vmatprep.subr.bf16.mxu0 %v1550
  %2256 = vmatpush1.bf16.msra.mxu0 %v1549
  %2257 = vmatprep.subr.bf16.mxu0 %v1556
  %2258 = vmatpush1.bf16.msra.mxu0 %v1555
  %2259 = vmatprep.subr.bf16.mxu0 %v1562
  %2260 = vmatpush1.bf16.msra.mxu0 %v1561
  %2261 = vmatprep.subr.bf16.mxu0 %v1568
  %2262 = vmatpush1.bf16.msra.mxu0 %v1567
  %2263 = vmatprep.subr.bf16.mxu0 %v1574
  %2264 = vmatpush1.bf16.msra.mxu0 %v1573
  %2265 = vmatprep.subr.bf16.mxu0 %v1580
  %2266 = vmatpush1.bf16.msra.mxu0 %v1579
  %2267 = vmatprep.subr.bf16.mxu0 %v1586
  %2268 = vmatpush1.bf16.msra.mxu0 %v1585
  %2269 = vmatprep.subr.bf16.mxu0 %v1592
  %2270 = vmatpush1.bf16.msra.mxu0 %v1591
  %2271 = vmatprep.subr.bf16.mxu0 %v1598
  %2272 = vmatpush1.bf16.msra.mxu0 %v1597
  %2273 = vmatprep.subr.bf16.mxu0 %v1604
  %2274 = vmatpush1.bf16.msra.mxu0 %v1603
  %2275 = vmatprep.mubr.bf16.mxu0 %v518
  %2276 = vmatmul.mubr.bf16.gmra.mrb[0].mxu0 %v517
  %v2277 = vpop.f32.mrb[0].mxu0
  %v2278 = vadd.f32 %v2215, %v2277
  %v2279 = vpop.f32.mrb[0].mxu0
  %v2280 = vadd.f32 %v2217, %v2279
  %v2281 = vpop.f32.mrb[0].mxu0
  %v2282 = vadd.f32 %v2219, %v2281
  %v2283 = vpop.f32.mrb[0].mxu0
  %v2284 = vadd.f32 %v2221, %v2283
  %2285 = vmatprep.mubr.bf16.mxu0 %v524
  %2286 = vmatmul.mubr.bf16.gmra.mrb[0].mxu0 %v523
  %v2287 = vpop.f32.mrb[0].mxu0
  %v2288 = vadd.f32 %v2225, %v2287
  %v2289 = vpop.f32.mrb[0].mxu0
  %v2290 = vadd.f32 %v2227, %v2289
  %v2291 = vpop.f32.mrb[0].mxu0
  %v2292 = vadd.f32 %v2229, %v2291
  %v2293 = vpop.f32.mrb[0].mxu0
  %v2294 = vadd.f32 %v2231, %v2293
  %2295 = vmatprep.mubr.bf16.mxu0 %v530
  %2296 = vmatmul.mubr.bf16.gmra.mrb[0].mxu0 %v529
  %v2297 = vpop.f32.mrb[0].mxu0
  %v2298 = vadd.f32 %v2235, %v2297
  %v2299 = vpop.f32.mrb[0].mxu0
  %v2300 = vadd.f32 %v2237, %v2299
  %v2301 = vpop.f32.mrb[0].mxu0
  %v2302 = vadd.f32 %v2239, %v2301
  %v2303 = vpop.f32.mrb[0].mxu0
  %v2304 = vadd.f32 %v2241, %v2303
  %2305 = vdwg.mxu0
  %2306 = vmatprep.subr.bf16.mxu0 %v1610
  %2307 = vmatpush1.bf16.msra.mxu0 %v1609
  %2308 = vmatprep.subr.bf16.mxu0 %v1616
  %2309 = vmatpush1.bf16.msra.mxu0 %v1615
  %2310 = vmatprep.subr.bf16.mxu0 %v1622
  %2311 = vmatpush1.bf16.msra.mxu0 %v1621
  %2312 = vmatprep.subr.bf16.mxu0 %v1628
  %2313 = vmatpush1.bf16.msra.mxu0 %v1627
  %2314 = vmatprep.subr.bf16.mxu0 %v1634
  %2315 = vmatpush1.bf16.msra.mxu0 %v1633
  %2316 = vmatprep.subr.bf16.mxu0 %v1640
  %2317 = vmatpush1.bf16.msra.mxu0 %v1639
  %2318 = vmatprep.subr.bf16.mxu0 %v1646
  %2319 = vmatpush1.bf16.msra.mxu0 %v1645
  %2320 = vmatprep.subr.bf16.mxu0 %v1652
  %2321 = vmatpush1.bf16.msra.mxu0 %v1651
  %2322 = vmatprep.subr.bf16.mxu0 %v1658
  %2323 = vmatpush1.bf16.msra.mxu0 %v1657
  %2324 = vmatprep.subr.bf16.mxu0 %v1664
  %2325 = vmatpush1.bf16.msra.mxu0 %v1663
  %2326 = vmatprep.subr.bf16.mxu0 %v1670
  %2327 = vmatpush1.bf16.msra.mxu0 %v1669
  %2328 = vmatprep.subr.bf16.mxu0 %v1676
  %2329 = vmatpush1.bf16.msra.mxu0 %v1675
  %2330 = vmatprep.subr.bf16.mxu0 %v1682
  %2331 = vmatpush1.bf16.msra.mxu0 %v1681
  %2332 = vmatprep.subr.bf16.mxu0 %v1688
  %2333 = vmatpush1.bf16.msra.mxu0 %v1687
  %2334 = vmatprep.subr.bf16.mxu0 %v1694
  %2335 = vmatpush1.bf16.msra.mxu0 %v1693
  %2336 = vmatprep.subr.bf16.mxu0 %v1700
  %2337 = vmatpush1.bf16.msra.mxu0 %v1699
  %2338 = vmatprep.mubr.bf16.mxu0 %v520
  %2339 = vmatmul.mubr.bf16.gmra.mrb[0].mxu0 %v519
  %v2340 = vpop.f32.mrb[0].mxu0
  %v2341 = vadd.f32 %v2278, %v2340
  %v2342 = vpop.f32.mrb[0].mxu0
  %v2343 = vadd.f32 %v2280, %v2342
  %v2344 = vpop.f32.mrb[0].mxu0
  %v2345 = vadd.f32 %v2282, %v2344
  %v2346 = vpop.f32.mrb[0].mxu0
  %v2347 = vadd.f32 %v2284, %v2346
  %2348 = vmatprep.mubr.bf16.mxu0 %v526
  %2349 = vmatmul.mubr.bf16.gmra.mrb[0].mxu0 %v525
  %v2350 = vpop.f32.mrb[0].mxu0
  %v2351 = vadd.f32 %v2288, %v2350
  %v2352 = vpop.f32.mrb[0].mxu0
  %v2353 = vadd.f32 %v2290, %v2352
  %v2354 = vpop.f32.mrb[0].mxu0
  %v2355 = vadd.f32 %v2292, %v2354
  %v2356 = vpop.f32.mrb[0].mxu0
  %v2357 = vadd.f32 %v2294, %v2356
  %2358 = vmatprep.mubr.bf16.mxu0 %v532
  %2359 = vmatmul.mubr.bf16.gmra.mrb[0].mxu0 %v531
  %v2360 = vpop.f32.mrb[0].mxu0
  %v2361 = vadd.f32 %v2298, %v2360
  %v2362 = vpop.f32.mrb[0].mxu0
  %v2363 = vadd.f32 %v2300, %v2362
  %v2364 = vpop.f32.mrb[0].mxu0
  %v2365 = vadd.f32 %v2302, %v2364
  %v2366 = vpop.f32.mrb[0].mxu0
  %v2367 = vadd.f32 %v2304, %v2366
  %2368 = vdwg.mxu0
  %2369 = vmatprep.subr.bf16.mxu0 %v1420
  %2370 = vmatpush1.bf16.msra.mxu0 %v1419
  %2371 = vmatprep.subr.bf16.mxu0 %v1426
  %2372 = vmatpush1.bf16.msra.mxu0 %v1425
  %2373 = vmatprep.subr.bf16.mxu0 %v1432
  %2374 = vmatpush1.bf16.msra.mxu0 %v1431
  %2375 = vmatprep.subr.bf16.mxu0 %v1438
  %2376 = vmatpush1.bf16.msra.mxu0 %v1437
  %2377 = vmatprep.subr.bf16.mxu0 %v1444
  %2378 = vmatpush1.bf16.msra.mxu0 %v1443
  %2379 = vmatprep.subr.bf16.mxu0 %v1450
  %2380 = vmatpush1.bf16.msra.mxu0 %v1449
  %2381 = vmatprep.subr.bf16.mxu0 %v1456
  %2382 = vmatpush1.bf16.msra.mxu0 %v1455
  %2383 = vmatprep.subr.bf16.mxu0 %v1462
  %2384 = vmatpush1.bf16.msra.mxu0 %v1461
  %2385 = vmatprep.subr.bf16.mxu0 %v1468
  %2386 = vmatpush1.bf16.msra.mxu0 %v1467
  %2387 = vmatprep.subr.bf16.mxu0 %v1474
  %2388 = vmatpush1.bf16.msra.mxu0 %v1473
  %2389 = vmatprep.subr.bf16.mxu0 %v1480
  %2390 = vmatpush1.bf16.msra.mxu0 %v1479
  %2391 = vmatprep.subr.bf16.mxu0 %v1486
  %2392 = vmatpush1.bf16.msra.mxu0 %v1485
  %2393 = vmatprep.subr.bf16.mxu0 %v1492
  %2394 = vmatpush1.bf16.msra.mxu0 %v1491
  %2395 = vmatprep.subr.bf16.mxu0 %v1498
  %2396 = vmatpush1.bf16.msra.mxu0 %v1497
  %2397 = vmatprep.subr.bf16.mxu0 %v1504
  %2398 = vmatpush1.bf16.msra.mxu0 %v1503
  %2399 = vmatprep.subr.bf16.mxu0 %v1510
  %2400 = vmatpush1.bf16.msra.mxu0 %v1509
  %2401 = vmatprep.mubr.bf16.mxu0 %v516
  %2402 = vmatmul.mubr.bf16.gmra.mrb[0].mxu0 %v515
  %v2403 = vpop.f32.mrb[0].mxu0
  %v2404 = vadd.f32 %v434, %v2403
  %v2405 = vpop.f32.mrb[0].mxu0
  %v2406 = vadd.f32 %v434, %v2405
  %v2407 = vpop.f32.mrb[0].mxu0
  %v2408 = vadd.f32 %v439, %v2407
  %v2409 = vpop.f32.mrb[0].mxu0
  %v2410 = vadd.f32 %v439, %v2409
  %2411 = vmatprep.mubr.bf16.mxu0 %v522
  %2412 = vmatmul.mubr.bf16.gmra.mrb[0].mxu0 %v521
  %v2413 = vpop.f32.mrb[0].mxu0
  %v2414 = vadd.f32 %v444, %v2413
  %v2415 = vpop.f32.mrb[0].mxu0
  %v2416 = vadd.f32 %v444, %v2415
  %v2417 = vpop.f32.mrb[0].mxu0
  %v2418 = vadd.f32 %v449, %v2417
  %v2419 = vpop.f32.mrb[0].mxu0
  %v2420 = vadd.f32 %v449, %v2419
  %2421 = vmatprep.mubr.bf16.mxu0 %v528
  %2422 = vmatmul.mubr.bf16.gmra.mrb[0].mxu0 %v527
  %v2423 = vpop.f32.mrb[0].mxu0
  %v2424 = vadd.f32 %v454, %v2423
  %v2425 = vpop.f32.mrb[0].mxu0
  %v2426 = vadd.f32 %v454, %v2425
  %v2427 = vpop.f32.mrb[0].mxu0
  %v2428 = vadd.f32 %v459, %v2427
  %v2429 = vpop.f32.mrb[0].mxu0
  %v2430 = vadd.f32 %v459, %v2429
  %2431 = vdwg.mxu0
  %2432 = vmatprep.subr.bf16.mxu0 %v1516
  %2433 = vmatpush1.bf16.msra.mxu0 %v1515
  %2434 = vmatprep.subr.bf16.mxu0 %v1522
  %2435 = vmatpush1.bf16.msra.mxu0 %v1521
  %2436 = vmatprep.subr.bf16.mxu0 %v1528
  %2437 = vmatpush1.bf16.msra.mxu0 %v1527
  %2438 = vmatprep.subr.bf16.mxu0 %v1534
  %2439 = vmatpush1.bf16.msra.mxu0 %v1533
  %2440 = vmatprep.subr.bf16.mxu0 %v1540
  %2441 = vmatpush1.bf16.msra.mxu0 %v1539
  %2442 = vmatprep.subr.bf16.mxu0 %v1546
  %2443 = vmatpush1.bf16.msra.mxu0 %v1545
  %2444 = vmatprep.subr.bf16.mxu0 %v1552
  %2445 = vmatpush1.bf16.msra.mxu0 %v1551
  %2446 = vmatprep.subr.bf16.mxu0 %v1558
  %2447 = vmatpush1.bf16.msra.mxu0 %v1557
  %2448 = vmatprep.subr.bf16.mxu0 %v1564
  %2449 = vmatpush1.bf16.msra.mxu0 %v1563
  %2450 = vmatprep.subr.bf16.mxu0 %v1570
  %2451 = vmatpush1.bf16.msra.mxu0 %v1569
  %2452 = vmatprep.subr.bf16.mxu0 %v1576
  %2453 = vmatpush1.bf16.msra.mxu0 %v1575
  %2454 = vmatprep.subr.bf16.mxu0 %v1582
  %2455 = vmatpush1.bf16.msra.mxu0 %v1581
  %2456 = vmatprep.subr.bf16.mxu0 %v1588
  %2457 = vmatpush1.bf16.msra.mxu0 %v1587
  %2458 = vmatprep.subr.bf16.mxu0 %v1594
  %2459 = vmatpush1.bf16.msra.mxu0 %v1593
  %2460 = vmatprep.subr.bf16.mxu0 %v1600
  %2461 = vmatpush1.bf16.msra.mxu0 %v1599
  %2462 = vmatprep.subr.bf16.mxu0 %v1606
  %2463 = vmatpush1.bf16.msra.mxu0 %v1605
  %2464 = vmatprep.mubr.bf16.mxu0 %v518
  %2465 = vmatmul.mubr.bf16.gmra.mrb[0].mxu0 %v517
  %v2466 = vpop.f32.mrb[0].mxu0
  %v2467 = vadd.f32 %v2404, %v2466
  %v2468 = vpop.f32.mrb[0].mxu0
  %v2469 = vadd.f32 %v2406, %v2468
  %v2470 = vpop.f32.mrb[0].mxu0
  %v2471 = vadd.f32 %v2408, %v2470
  %v2472 = vpop.f32.mrb[0].mxu0
  %v2473 = vadd.f32 %v2410, %v2472
  %2474 = vmatprep.mubr.bf16.mxu0 %v524
  %2475 = vmatmul.mubr.bf16.gmra.mrb[0].mxu0 %v523
  %v2476 = vpop.f32.mrb[0].mxu0
  %v2477 = vadd.f32 %v2414, %v2476
  %v2478 = vpop.f32.mrb[0].mxu0
  %v2479 = vadd.f32 %v2416, %v2478
  %v2480 = vpop.f32.mrb[0].mxu0
  %v2481 = vadd.f32 %v2418, %v2480
  %v2482 = vpop.f32.mrb[0].mxu0
  %v2483 = vadd.f32 %v2420, %v2482
  %2484 = vmatprep.mubr.bf16.mxu0 %v530
  %2485 = vmatmul.mubr.bf16.gmra.mrb[0].mxu0 %v529
  %v2486 = vpop.f32.mrb[0].mxu0
  %v2487 = vadd.f32 %v2424, %v2486
  %v2488 = vpop.f32.mrb[0].mxu0
  %v2489 = vadd.f32 %v2426, %v2488
  %v2490 = vpop.f32.mrb[0].mxu0
  %v2491 = vadd.f32 %v2428, %v2490
  %v2492 = vpop.f32.mrb[0].mxu0
  %v2493 = vadd.f32 %v2430, %v2492
  %2494 = vdwg.mxu0
  %2495 = vmatprep.subr.bf16.mxu0 %v1612
  %2496 = vmatpush1.bf16.msra.mxu0 %v1611
  %2497 = vmatprep.subr.bf16.mxu0 %v1618
  %2498 = vmatpush1.bf16.msra.mxu0 %v1617
  %2499 = vmatprep.subr.bf16.mxu0 %v1624
  %2500 = vmatpush1.bf16.msra.mxu0 %v1623
  %2501 = vmatprep.subr.bf16.mxu0 %v1630
  %2502 = vmatpush1.bf16.msra.mxu0 %v1629
  %2503 = vmatprep.subr.bf16.mxu0 %v1636
  %2504 = vmatpush1.bf16.msra.mxu0 %v1635
  %2505 = vmatprep.subr.bf16.mxu0 %v1642
  %2506 = vmatpush1.bf16.msra.mxu0 %v1641
  %2507 = vmatprep.subr.bf16.mxu0 %v1648
  %2508 = vmatpush1.bf16.msra.mxu0 %v1647
  %2509 = vmatprep.subr.bf16.mxu0 %v1654
  %2510 = vmatpush1.bf16.msra.mxu0 %v1653
  %2511 = vmatprep.subr.bf16.mxu0 %v1660
  %2512 = vmatpush1.bf16.msra.mxu0 %v1659
  %2513 = vmatprep.subr.bf16.mxu0 %v1666
  %2514 = vmatpush1.bf16.msra.mxu0 %v1665
  %2515 = vmatprep.subr.bf16.mxu0 %v1672
  %2516 = vmatpush1.bf16.msra.mxu0 %v1671
  %2517 = vmatprep.subr.bf16.mxu0 %v1678
  %2518 = vmatpush1.bf16.msra.mxu0 %v1677
  %2519 = vmatprep.subr.bf16.mxu0 %v1684
  %2520 = vmatpush1.bf16.msra.mxu0 %v1683
  %2521 = vmatprep.subr.bf16.mxu0 %v1690
  %2522 = vmatpush1.bf16.msra.mxu0 %v1689
  %2523 = vmatprep.subr.bf16.mxu0 %v1696
  %2524 = vmatpush1.bf16.msra.mxu0 %v1695
  %2525 = vmatprep.subr.bf16.mxu0 %v1702
  %2526 = vmatpush1.bf16.msra.mxu0 %v1701
  %2527 = vmatprep.mubr.bf16.mxu0 %v520
  %2528 = vmatmul.mubr.bf16.gmra.mrb[0].mxu0 %v519
  %v2529 = vpop.f32.mrb[0].mxu0
  %v2530 = vadd.f32 %v2467, %v2529
  %v2531 = vpop.f32.mrb[0].mxu0
  %v2532 = vadd.f32 %v2469, %v2531
  %v2533 = vpop.f32.mrb[0].mxu0
  %v2534 = vadd.f32 %v2471, %v2533
  %v2535 = vpop.f32.mrb[0].mxu0
  %v2536 = vadd.f32 %v2473, %v2535
  %2537 = vmatprep.mubr.bf16.mxu0 %v526
  %2538 = vmatmul.mubr.bf16.gmra.mrb[0].mxu0 %v525
  %v2539 = vpop.f32.mrb[0].mxu0
  %v2540 = vadd.f32 %v2477, %v2539
  %v2541 = vpop.f32.mrb[0].mxu0
  %v2542 = vadd.f32 %v2479, %v2541
  %v2543 = vpop.f32.mrb[0].mxu0
  %v2544 = vadd.f32 %v2481, %v2543
  %v2545 = vpop.f32.mrb[0].mxu0
  %v2546 = vadd.f32 %v2483, %v2545
  %2547 = vmatprep.mubr.bf16.mxu0 %v532
  %2548 = vmatmul.mubr.bf16.gmra.mrb[0].mxu0 %v531
  %v2549 = vpop.f32.mrb[0].mxu0
  %v2550 = vadd.f32 %v2487, %v2549
  %v2551 = vpop.f32.mrb[0].mxu0
  %v2552 = vadd.f32 %v2489, %v2551
  %v2553 = vpop.f32.mrb[0].mxu0
  %v2554 = vadd.f32 %v2491, %v2553
  %v2555 = vpop.f32.mrb[0].mxu0
  %v2556 = vadd.f32 %v2493, %v2555
  %2557 = vdwg.mxu0
  %v2558 = vmax.f32 %v2152, %v2162
  %v2559 = vmax.f32 %v2154, %v2164
  %v2560 = vmax.f32 %v2341, %v2351
  %v2561 = vmax.f32 %v2343, %v2353
  %v2562 = vmax.f32 %v2530, %v2540
  %v2563 = vmax.f32 %v2532, %v2542
  %v2564 = vmax.f32 %v2156, %v2166
  %v2565 = vmax.f32 %v2158, %v2168
  %v2566 = vmax.f32 %v2345, %v2355
  %v2567 = vmax.f32 %v2347, %v2357
  %v2568 = vmax.f32 %v2534, %v2544
  %v2569 = vmax.f32 %v2536, %v2546
  %v2570 = vmax.f32 %v2558, %v2172
  %v2571 = vmax.f32 %v2559, %v2174
  %v2572 = vmax.f32 %v2560, %v2361
  %v2573 = vmax.f32 %v2561, %v2363
  %v2574 = vmax.f32 %v2562, %v2550
  %v2575 = vmax.f32 %v2563, %v2552
  %v2576 = vmax.f32 %v2564, %v2176
  %v2577 = vmax.f32 %v2565, %v2178
  %v2578 = vmax.f32 %v2566, %v2365
  %v2579 = vmax.f32 %v2567, %v2367
  %v2580 = vmax.f32 %v2568, %v2554
  %v2581 = vmax.f32 %v2569, %v2556
  %v2583 = vlaneseq
  %v2584 = vshrl.u32 %v2583, 7
  %v2585 = vsub.s32 0, %v2584
  %v2586 = vrot.slane %v405, %v2585
  %v2587 = vlaneseq
  %v2588 = vshrl.u32 %v2587, 7
  %v2589 = vsub.s32 1, %v2588
  %v2590 = vrot.slane %v405, %v2589
  %v2591 = vlaneseq
  %v2592 = vshrl.u32 %v2591, 7
  %v2593 = vsub.s32 2, %v2592
  %v2594 = vrot.slane %v405, %v2593
  %v2595 = vlaneseq
  %v2596 = vshrl.u32 %v2595, 7
  %v2597 = vsub.s32 3, %v2596
  %v2598 = vrot.slane %v405, %v2597
  %v2599 = vlaneseq
  %v2600 = vshrl.u32 %v2599, 7
  %v2601 = vsub.s32 4, %v2600
  %v2602 = vrot.slane %v405, %v2601
  %v2603 = vlaneseq
  %v2604 = vshrl.u32 %v2603, 7
  %v2605 = vsub.s32 5, %v2604
  %v2606 = vrot.slane %v405, %v2605
  %v2613 = vadd.f32 %v2570, %v2586
  %v2614 = vadd.f32 %v2571, %v2590
  %v2615 = vadd.f32 %v2572, %v2594
  %v2616 = vadd.f32 %v2573, %v2598
  %v2617 = vadd.f32 %v2574, %v2602
  %v2618 = vadd.f32 %v2575, %v2606
  %v2619 = vadd.f32 %v2576, %v2586
  %v2620 = vadd.f32 %v2577, %v2590
  %v2621 = vadd.f32 %v2578, %v2594
  %v2622 = vadd.f32 %v2579, %v2598
  %v2623 = vadd.f32 %v2580, %v2602
  %v2624 = vadd.f32 %v2581, %v2606
  %v2625 = vld [vmem:[%s2] sm:$0xff]
  %v2626 = vld [vmem:[%s2 + $0x8] sm:$0xff]
  %2628 = vset.pattern.permute.xlu0 0
  %2629 = vperm.xlu0 %2628, %v2625
  %v2630 = vpop.permute.xlu0 %2629
  %2633 = vset.pattern.permute.xlu0 0
  %2634 = vperm.xlu0 %2633, %v2626
  %v2635 = vpop.permute.xlu0 %2634
  %v2637 = vmul.f32 %v2613, %v2630
  %v2638 = vmul.f32 %v2614, %v2630
  %v2639 = vmul.f32 %v2615, %v2630
  %v2640 = vmul.f32 %v2616, %v2630
  %v2641 = vmul.f32 %v2617, %v2630
  %v2642 = vmul.f32 %v2618, %v2630
  %v2643 = vmul.f32 %v2619, %v2635
  %v2644 = vmul.f32 %v2620, %v2635
  %v2645 = vmul.f32 %v2621, %v2635
  %v2646 = vmul.f32 %v2622, %v2635
  %v2647 = vmul.f32 %v2623, %v2635
  %v2648 = vmul.f32 %v2624, %v2635
  %v2649 = vpack.c.bf16 %v2643, %v2637
  %v2650 = vpack.c.bf16 %v2644, %v2638
  %v2651 = vpack.c.bf16 %v2645, %v2639
  %v2652 = vpack.c.bf16 %v2646, %v2640
  %v2653 = vpack.c.bf16 %v2647, %v2641
  %v2654 = vpack.c.bf16 %v2648, %v2642
  %v2656 = vlaneseq
  %v2657 = vshrl.u32 %v2656, 7
  %v2658 = vsub.s32 0, %v2657
  %v2659 = vrot.slane %v406, %v2658
  %v2757 = vunpack.c.l.b16 %v309
  %v2758 = vunpack.c.l.b16 %v310
  %v2759 = vunpack.c.l.b16 %v311
  %v2760 = vunpack.c.l.b16 %v312
  %v2761 = vunpack.c.l.b16 %v313
  %v2762 = vunpack.c.l.b16 %v314
  %v2763 = vunpack.c.l.b16 %v315
  %v2764 = vunpack.c.l.b16 %v316
  %v2765 = vunpack.c.l.b16 %v317
  %v2766 = vunpack.c.l.b16 %v318
  %v2767 = vunpack.c.l.b16 %v319
  %v2768 = vunpack.c.l.b16 %v320
  %v2769 = vunpack.c.l.b16 %v321
  %v2770 = vunpack.c.l.b16 %v322
  %v2771 = vunpack.c.l.b16 %v323
  %v2772 = vunpack.c.l.b16 %v324
  %v2773 = vunpack.c.l.b16 %v325
  %v2774 = vunpack.c.l.b16 %v326
  %v2775 = vunpack.c.l.b16 %v327
  %v2776 = vunpack.c.l.b16 %v328
  %v2777 = vunpack.c.l.b16 %v329
  %v2778 = vunpack.c.l.b16 %v330
  %v2779 = vunpack.c.l.b16 %v331
  %v2780 = vunpack.c.l.b16 %v332
  %v2781 = vunpack.c.l.b16 %v333
  %v2782 = vunpack.c.l.b16 %v334
  %v2783 = vunpack.c.l.b16 %v335
  %v2784 = vunpack.c.l.b16 %v336
  %v2785 = vunpack.c.l.b16 %v337
  %v2786 = vunpack.c.l.b16 %v338
  %v2787 = vunpack.c.l.b16 %v339
  %v2788 = vunpack.c.l.b16 %v340
  %v2789 = vunpack.c.l.b16 %v341
  %v2790 = vunpack.c.l.b16 %v342
  %v2791 = vunpack.c.l.b16 %v343
  %v2792 = vunpack.c.l.b16 %v344
  %v2793 = vunpack.c.l.b16 %v345
  %v2794 = vunpack.c.l.b16 %v346
  %v2795 = vunpack.c.l.b16 %v347
  %v2796 = vunpack.c.l.b16 %v348
  %v2797 = vunpack.c.l.b16 %v349
  %v2798 = vunpack.c.l.b16 %v350
  %v2799 = vunpack.c.l.b16 %v351
  %v2800 = vunpack.c.l.b16 %v352
  %v2801 = vunpack.c.l.b16 %v353
  %v2802 = vunpack.c.l.b16 %v354
  %v2803 = vunpack.c.l.b16 %v355
  %v2804 = vunpack.c.l.b16 %v356
  %v2805 = vunpack.c.l.b16 %v357
  %v2806 = vunpack.c.l.b16 %v358
  %v2807 = vunpack.c.l.b16 %v359
  %v2808 = vunpack.c.l.b16 %v360
  %v2809 = vunpack.c.l.b16 %v361
  %v2810 = vunpack.c.l.b16 %v362
  %v2811 = vunpack.c.l.b16 %v363
  %v2812 = vunpack.c.l.b16 %v364
  %v2813 = vunpack.c.l.b16 %v365
  %v2814 = vunpack.c.l.b16 %v366
  %v2815 = vunpack.c.l.b16 %v367
  %v2816 = vunpack.c.l.b16 %v368
  %v2817 = vunpack.c.l.b16 %v369
  %v2818 = vunpack.c.l.b16 %v370
  %v2819 = vunpack.c.l.b16 %v371
  %v2820 = vunpack.c.l.b16 %v372
  %v2821 = vunpack.c.l.b16 %v373
  %v2822 = vunpack.c.l.b16 %v374
  %v2823 = vunpack.c.l.b16 %v375
  %v2824 = vunpack.c.l.b16 %v376
  %v2825 = vunpack.c.l.b16 %v377
  %v2826 = vunpack.c.l.b16 %v378
  %v2827 = vunpack.c.l.b16 %v379
  %v2828 = vunpack.c.l.b16 %v380
  %v2829 = vunpack.c.l.b16 %v381
  %v2830 = vunpack.c.l.b16 %v382
  %v2831 = vunpack.c.l.b16 %v383
  %v2832 = vunpack.c.l.b16 %v384
  %v2833 = vunpack.c.l.b16 %v385
  %v2834 = vunpack.c.l.b16 %v386
  %v2835 = vunpack.c.l.b16 %v387
  %v2836 = vunpack.c.l.b16 %v388
  %v2837 = vunpack.c.l.b16 %v389
  %v2838 = vunpack.c.l.b16 %v390
  %v2839 = vunpack.c.l.b16 %v391
  %v2840 = vunpack.c.l.b16 %v392
  %v2841 = vunpack.c.l.b16 %v393
  %v2842 = vunpack.c.l.b16 %v394
  %v2843 = vunpack.c.l.b16 %v395
  %v2844 = vunpack.c.l.b16 %v396
  %v2845 = vunpack.c.l.b16 %v397
  %v2846 = vunpack.c.l.b16 %v398
  %v2847 = vunpack.c.l.b16 %v399
  %v2848 = vunpack.c.l.b16 %v400
  %v2849 = vunpack.c.l.b16 %v401
  %v2850 = vunpack.c.l.b16 %v402
  %v2851 = vunpack.c.l.b16 %v403
  %v2852 = vunpack.c.l.b16 %v404
  %v2853 = vpack.c.b16 %v2758, %v2757
  %v2854 = vpack.c.b16 %v2760, %v2759
  %v2855 = vpack.c.b16 %v2762, %v2761
  %v2856 = vpack.c.b16 %v2764, %v2763
  %v2857 = vpack.c.b16 %v2766, %v2765
  %v2858 = vpack.c.b16 %v2768, %v2767
  %v2859 = vpack.c.b16 %v2770, %v2769
  %v2860 = vpack.c.b16 %v2772, %v2771
  %v2861 = vpack.c.b16 %v2774, %v2773
  %v2862 = vpack.c.b16 %v2776, %v2775
  %v2863 = vpack.c.b16 %v2778, %v2777
  %v2864 = vpack.c.b16 %v2780, %v2779
  %v2865 = vpack.c.b16 %v2782, %v2781
  %v2866 = vpack.c.b16 %v2784, %v2783
  %v2867 = vpack.c.b16 %v2786, %v2785
  %v2868 = vpack.c.b16 %v2788, %v2787
  %v2869 = vpack.c.b16 %v2790, %v2789
  %v2870 = vpack.c.b16 %v2792, %v2791
  %v2871 = vpack.c.b16 %v2794, %v2793
  %v2872 = vpack.c.b16 %v2796, %v2795
  %v2873 = vpack.c.b16 %v2798, %v2797
  %v2874 = vpack.c.b16 %v2800, %v2799
  %v2875 = vpack.c.b16 %v2802, %v2801
  %v2876 = vpack.c.b16 %v2804, %v2803
  %v2877 = vpack.c.b16 %v2806, %v2805
  %v2878 = vpack.c.b16 %v2808, %v2807
  %v2879 = vpack.c.b16 %v2810, %v2809
  %v2880 = vpack.c.b16 %v2812, %v2811
  %v2881 = vpack.c.b16 %v2814, %v2813
  %v2882 = vpack.c.b16 %v2816, %v2815
  %v2883 = vpack.c.b16 %v2818, %v2817
  %v2884 = vpack.c.b16 %v2820, %v2819
  %v2885 = vpack.c.b16 %v2822, %v2821
  %v2886 = vpack.c.b16 %v2824, %v2823
  %v2887 = vpack.c.b16 %v2826, %v2825
  %v2888 = vpack.c.b16 %v2828, %v2827
  %v2889 = vpack.c.b16 %v2830, %v2829
  %v2890 = vpack.c.b16 %v2832, %v2831
  %v2891 = vpack.c.b16 %v2834, %v2833
  %v2892 = vpack.c.b16 %v2836, %v2835
  %v2893 = vpack.c.b16 %v2838, %v2837
  %v2894 = vpack.c.b16 %v2840, %v2839
  %v2895 = vpack.c.b16 %v2842, %v2841
  %v2896 = vpack.c.b16 %v2844, %v2843
  %v2897 = vpack.c.b16 %v2846, %v2845
  %v2898 = vpack.c.b16 %v2848, %v2847
  %v2899 = vpack.c.b16 %v2850, %v2849
  %v2900 = vpack.c.b16 %v2852, %v2851
  %2949 = vmatprep.subr.bf16.mxu0 0
  %2950 = vmatpush1.bf16.msra.mxu0 %v2853
  %2951 = vmatprep.subr.bf16.mxu0 0
  %2952 = vmatpush1.bf16.msra.mxu0 %v2854
  %2953 = vmatprep.subr.bf16.mxu0 0
  %2954 = vmatpush1.bf16.msra.mxu0 %v2855
  %2955 = vmatprep.subr.bf16.mxu0 0
  %2956 = vmatpush1.bf16.msra.mxu0 %v2856
  %2957 = vmatprep.subr.bf16.mxu0 0
  %2958 = vmatpush1.bf16.msra.mxu0 %v2857
  %2959 = vmatprep.subr.bf16.mxu0 0
  %2960 = vmatpush1.bf16.msra.mxu0 %v2858
  %2961 = vmatprep.subr.bf16.mxu0 0
  %2962 = vmatpush1.bf16.msra.mxu0 %v2859
  %2963 = vmatprep.subr.bf16.mxu0 0
  %2964 = vmatpush1.bf16.msra.mxu0 %v2860
  %2965 = vmatprep.subr.bf16.mxu0 0
  %2966 = vmatpush1.bf16.msra.mxu0 %v2861
  %2967 = vmatprep.subr.bf16.mxu0 0
  %2968 = vmatpush1.bf16.msra.mxu0 %v2862
  %2969 = vmatprep.subr.bf16.mxu0 0
  %2970 = vmatpush1.bf16.msra.mxu0 %v2863
  %2971 = vmatprep.subr.bf16.mxu0 0
  %2972 = vmatpush1.bf16.msra.mxu0 %v2864
  %2973 = vmatprep.subr.bf16.mxu0 0
  %2974 = vmatpush1.bf16.msra.mxu0 %v2865
  %2975 = vmatprep.subr.bf16.mxu0 0
  %2976 = vmatpush1.bf16.msra.mxu0 %v2866
  %2977 = vmatprep.subr.bf16.mxu0 0
  %2978 = vmatpush1.bf16.msra.mxu0 %v2867
  %2979 = vmatprep.subr.bf16.mxu0 0
  %2980 = vmatpush1.bf16.msra.mxu0 %v2868
  %2981 = vmatprep.mubr.bf16.mxu0 %v2650
  %2982 = vmatmul.mubr.bf16.gmra.mrb[0].mxu0 %v2649
  %v2983 = vpop.f32.mrb[0].mxu0
  %v2984 = vadd.f32 %v2659, %v2983
  %v2985 = vpop.f32.mrb[0].mxu0
  %v2986 = vpop.f32.mrb[0].mxu0
  %v2987 = vadd.f32 %v2659, %v2986
  %v2988 = vpop.f32.mrb[0].mxu0
  %2989 = vdwg.mxu0
  %2990 = vmatprep.subr.bf16.mxu0 0
  %2991 = vmatpush1.bf16.msra.mxu0 %v2869
  %2992 = vmatprep.subr.bf16.mxu0 0
  %2993 = vmatpush1.bf16.msra.mxu0 %v2870
  %2994 = vmatprep.subr.bf16.mxu0 0
  %2995 = vmatpush1.bf16.msra.mxu0 %v2871
  %2996 = vmatprep.subr.bf16.mxu0 0
  %2997 = vmatpush1.bf16.msra.mxu0 %v2872
  %2998 = vmatprep.subr.bf16.mxu0 0
  %2999 = vmatpush1.bf16.msra.mxu0 %v2873
  %3000 = vmatprep.subr.bf16.mxu0 0
  %3001 = vmatpush1.bf16.msra.mxu0 %v2874
  %3002 = vmatprep.subr.bf16.mxu0 0
  %3003 = vmatpush1.bf16.msra.mxu0 %v2875
  %3004 = vmatprep.subr.bf16.mxu0 0
  %3005 = vmatpush1.bf16.msra.mxu0 %v2876
  %3006 = vmatprep.subr.bf16.mxu0 0
  %3007 = vmatpush1.bf16.msra.mxu0 %v2877
  %3008 = vmatprep.subr.bf16.mxu0 0
  %3009 = vmatpush1.bf16.msra.mxu0 %v2878
  %3010 = vmatprep.subr.bf16.mxu0 0
  %3011 = vmatpush1.bf16.msra.mxu0 %v2879
  %3012 = vmatprep.subr.bf16.mxu0 0
  %3013 = vmatpush1.bf16.msra.mxu0 %v2880
  %3014 = vmatprep.subr.bf16.mxu0 0
  %3015 = vmatpush1.bf16.msra.mxu0 %v2881
  %3016 = vmatprep.subr.bf16.mxu0 0
  %3017 = vmatpush1.bf16.msra.mxu0 %v2882
  %3018 = vmatprep.subr.bf16.mxu0 0
  %3019 = vmatpush1.bf16.msra.mxu0 %v2883
  %3020 = vmatprep.subr.bf16.mxu0 0
  %3021 = vmatpush1.bf16.msra.mxu0 %v2884
  %3022 = vmatprep.mubr.bf16.mxu0 %v2652
  %3023 = vmatmul.mubr.bf16.gmra.mrb[0].mxu0 %v2651
  %v3024 = vpop.f32.mrb[0].mxu0
  %v3025 = vadd.f32 %v2984, %v3024
  %v3026 = vpop.f32.mrb[0].mxu0
  %v3027 = vpop.f32.mrb[0].mxu0
  %v3028 = vadd.f32 %v2987, %v3027
  %v3029 = vpop.f32.mrb[0].mxu0
  %3030 = vdwg.mxu0
  %3031 = vmatprep.subr.bf16.mxu0 0
  %3032 = vmatpush1.bf16.msra.mxu0 %v2885
  %3033 = vmatprep.subr.bf16.mxu0 0
  %3034 = vmatpush1.bf16.msra.mxu0 %v2886
  %3035 = vmatprep.subr.bf16.mxu0 0
  %3036 = vmatpush1.bf16.msra.mxu0 %v2887
  %3037 = vmatprep.subr.bf16.mxu0 0
  %3038 = vmatpush1.bf16.msra.mxu0 %v2888
  %3039 = vmatprep.subr.bf16.mxu0 0
  %3040 = vmatpush1.bf16.msra.mxu0 %v2889
  %3041 = vmatprep.subr.bf16.mxu0 0
  %3042 = vmatpush1.bf16.msra.mxu0 %v2890
  %3043 = vmatprep.subr.bf16.mxu0 0
  %3044 = vmatpush1.bf16.msra.mxu0 %v2891
  %3045 = vmatprep.subr.bf16.mxu0 0
  %3046 = vmatpush1.bf16.msra.mxu0 %v2892
  %3047 = vmatprep.subr.bf16.mxu0 0
  %3048 = vmatpush1.bf16.msra.mxu0 %v2893
  %3049 = vmatprep.subr.bf16.mxu0 0
  %3050 = vmatpush1.bf16.msra.mxu0 %v2894
  %3051 = vmatprep.subr.bf16.mxu0 0
  %3052 = vmatpush1.bf16.msra.mxu0 %v2895
  %3053 = vmatprep.subr.bf16.mxu0 0
  %3054 = vmatpush1.bf16.msra.mxu0 %v2896
  %3055 = vmatprep.subr.bf16.mxu0 0
  %3056 = vmatpush1.bf16.msra.mxu0 %v2897
  %3057 = vmatprep.subr.bf16.mxu0 0
  %3058 = vmatpush1.bf16.msra.mxu0 %v2898
  %3059 = vmatprep.subr.bf16.mxu0 0
  %3060 = vmatpush1.bf16.msra.mxu0 %v2899
  %3061 = vmatprep.subr.bf16.mxu0 0
  %3062 = vmatpush1.bf16.msra.mxu0 %v2900
  %3063 = vmatprep.mubr.bf16.mxu0 %v2654
  %3064 = vmatmul.mubr.bf16.gmra.mrb[0].mxu0 %v2653
  %v3065 = vpop.f32.mrb[0].mxu0
  %v3066 = vadd.f32 %v3025, %v3065
  %v3067 = vpop.f32.mrb[0].mxu0
  %v3068 = vpop.f32.mrb[0].mxu0
  %v3069 = vadd.f32 %v3028, %v3068
  %v3070 = vpop.f32.mrb[0].mxu0
  %3071 = vdwg.mxu0
  %3072 = vst [vmem:[%s5] sm:$0xff] %v3066
  %3073 = vst [vmem:[%s5 + $0x8] sm:$0xff] %v3069
  // Predicated region
  $region22: #{message_encoder_bert_forward.1} parent=0 // pred_check
    _
  $region23: #{message_encoder_bert_forward.1} parent=0 // pred_check_branch
    %3075 = sbr.rel (0) target = $region25
  $region24: #{message_encoder_bert_forward.1} parent=0 // pred_region
    _
  $region25: #{message_encoder_bert_forward.1} parent=0 // pred_fallthru
    _
  // Predicated region
  $region26: #{message_encoder_bert_forward.1} parent=0 // pred_check
    _
  $region27: #{message_encoder_bert_forward.1} parent=0 // pred_check_branch
    %3077 = sbr.rel (0) target = $region29
  $region28: #{message_encoder_bert_forward.1} parent=0 // pred_region
    _
  $region29: #{message_encoder_bert_forward.1} parent=0 // pred_fallthru
    _

</llo_original>
